<compile_context>
chip_gen: v6e
topology: v6e:2x2x1
jax: 0.10.0
libtpu: 0.0.40
codegen_flags: <defaults>
</compile_context>

<pallas_src>
import jax
import jax.numpy as jnp
from jax.experimental import pallas as pl
from jax.experimental.pallas import tpu as pltpu

# ---- hyperparameters -------------------------------------------------------
INPUT_SIZE = 4
OUT_CHANNELS = 8
C2 = OUT_CHANNELS * 2          # 16
HIDDEN_SIZE = 32
NUM_LAYERS = 1                 # hp.num_layers
OUTPUT_SIZE = 4
BATCH = 2
SEQ = 8


# ---- Pallas kernel ---------------------------------------------------------
def cnn_lstm_kernel(x_ref, w1_ref, b1_ref, w2_ref, b2_ref,
                    wih_ref, whh_ref, blstm_ref, wfc_ref, bfc_ref,
                    out_ref, pad1_ref, pad2_ref, xg_ref, hseq_ref):
    B, T, CIN = x_ref.shape
    rows = B * T
    H = HIDDEN_SIZE

    # ---- Conv1d(k=3, padding=1) + ReLU, via zero-padded time axis -----------
    # pad scratch layout: (B, T+2, C); row 0 and row T+1 of every batch stay 0,
    # so shifted reads give x[t-1] / x[t+1] with the correct zero padding and
    # no masks or sublane-shift concats.
    x = x_ref[...]                                         # (B, T, Cin)
    pad1_ref[...] = jnp.zeros((B, T + 2, CIN), jnp.float32)
    pad1_ref[:, 1:T + 1, :] = x
    xp = pad1_ref[:, 0:T, :].reshape(rows, CIN)            # x[t-1]
    xn = pad1_ref[:, 2:T + 2, :].reshape(rows, CIN)        # x[t+1]
    xm = x.reshape(rows, CIN)                              # x[t]
    xcat = jnp.concatenate([xp, xm, xn], axis=1)           # (rows, 3*Cin)
    h1 = jnp.maximum(
        jnp.dot(xcat, w1_ref[...], preferred_element_type=jnp.float32)
        + b1_ref[...], 0.0)                                # (rows, C1)

    # ---- Conv2 + ReLU --------------------------------------------------------
    C1 = h1.shape[1]
    pad2_ref[...] = jnp.zeros((B, T + 2, C1), jnp.float32)
    pad2_ref[:, 1:T + 1, :] = h1.reshape(B, T, C1)
    hp_ = pad2_ref[:, 0:T, :].reshape(rows, C1)
    hn_ = pad2_ref[:, 2:T + 2, :].reshape(rows, C1)
    hcat = jnp.concatenate([hp_, h1, hn_], axis=1)         # (rows, 3*C1)
    h2 = jnp.maximum(
        jnp.dot(hcat, w2_ref[...], preferred_element_type=jnp.float32)
        + b2_ref[...], 0.0)                                # (rows, C2)

    # ---- LSTM: input-gate contribution for every (b, t) at once -------------
    xg = jnp.dot(h2, wih_ref[...],
                 preferred_element_type=jnp.float32) + blstm_ref[...]
    xg_ref[...] = xg.reshape(B, T, 4 * H)                  # stage in VMEM

    whh = whh_ref[...]                                     # (H, 4H), loaded once
    h = jnp.zeros((B, H), jnp.float32)
    c = jnp.zeros((B, H), jnp.float32)
    for t in range(T):                                     # T small & static -> unroll
        # per-step gate inputs come from a static VMEM load (not register slicing)
        g = xg_ref[:, t, :] + jnp.dot(h, whh,
                                      preferred_element_type=jnp.float32)  # (B, 4H)
        # two full-row EUP passes, then lane-slice the four gates (i, f, g, o)
        sig = jax.nn.sigmoid(g)
        tnh = jnp.tanh(g)
        i_g = sig[:, 0 * H:1 * H]
        f_g = sig[:, 1 * H:2 * H]
        g_g = tnh[:, 2 * H:3 * H]
        o_g = sig[:, 3 * H:4 * H]
        c = f_g * c + i_g * g_g
        h = o_g * jnp.tanh(c)
        hseq_ref[:, t, :] = h                              # straight into VMEM scratch

    # ---- final Linear over the whole (rows, H) slab --------------------------
    y = jnp.dot(hseq_ref[...].reshape(rows, H), wfc_ref[...],
                preferred_element_type=jnp.float32) + bfc_ref[...]
    out_ref[...] = y.reshape(B, T, OUTPUT_SIZE).astype(out_ref.dtype)


def cnn_lstm_forward(x, params):
    B, T, Cin = x.shape
    full = lambda shape: pl.BlockSpec(shape, lambda i: (0,) * len(shape))
    in_specs = [
        full((B, T, Cin)),                        # x, native (B,T,Cin) layout
        full((3 * INPUT_SIZE, OUT_CHANNELS)),     # conv1 fused weight
        full((1, OUT_CHANNELS)),                  # conv1 bias
        full((3 * OUT_CHANNELS, C2)),             # conv2 fused weight
        full((1, C2)),                            # conv2 bias
        full((C2, 4 * HIDDEN_SIZE)),              # W_ih^T
        full((HIDDEN_SIZE, 4 * HIDDEN_SIZE)),     # W_hh^T
        full((1, 4 * HIDDEN_SIZE)),               # b_ih + b_hh
        full((HIDDEN_SIZE, OUTPUT_SIZE)),         # fc W^T
        full((1, OUTPUT_SIZE)),                   # fc b
    ]
    out_spec = full((B, T, OUTPUT_SIZE))

    return pl.pallas_call(
        cnn_lstm_kernel,
        out_shape=jax.ShapeDtypeStruct((B, T, OUTPUT_SIZE), jnp.float32),
        grid=(1,),                                # single program: whole batch
        in_specs=in_specs,
        out_specs=out_spec,
        scratch_shapes=[
            pltpu.VMEM((B, T + 2, INPUT_SIZE), jnp.float32),    # conv1 zero-pad
            pltpu.VMEM((B, T + 2, OUT_CHANNELS), jnp.float32),  # conv2 zero-pad
            pltpu.VMEM((B, T, 4 * HIDDEN_SIZE), jnp.float32),   # staged xg
            pltpu.VMEM((B, T, HIDDEN_SIZE), jnp.float32),       # hidden-state slab
        ],
        compiler_params=pltpu.CompilerParams(dimension_semantics=("arbitrary",)),
    )(x, params["w1"], params["b1"], params["w2"], params["b2"],
      params["wih"], params["whh"], params["blstm"],
      params["wfc"], params["bfc"])


# ---- pure-JAX reference (for correctness check) ----------------------------
def ref_forward(x, params):
    w1 = params["w1"].reshape(3, INPUT_SIZE, OUT_CHANNELS)
    w2 = params["w2"].reshape(3, OUT_CHANNELS, C2)

    def conv3_relu(xin, w, b):                # xin: (B,T,Cin); w: (3,Cin,Cout)
        z = jnp.zeros_like(xin[:, :1, :])
        xp = jnp.concatenate([z, xin[:, :-1, :]], axis=1)
        xn = jnp.concatenate([xin[:, 1:, :], z], axis=1)
        y = (jnp.einsum("btc,co->bto", xp, w[0])
             + jnp.einsum("btc,co->bto", xin, w[1])
             + jnp.einsum("btc,co->bto", xn, w[2]) + b)
        return jnp.maximum(y, 0.0)

    h1 = conv3_relu(x, w1, params["b1"])
    h2 = conv3_relu(h1, w2, params["b2"])

    B, T, _ = h2.shape
    H = HIDDEN_SIZE
    xg = jnp.einsum("btc,cg->btg", h2, params["wih"]) + params["blstm"]
    h = jnp.zeros((B, H), jnp.float32)
    c = jnp.zeros((B, H), jnp.float32)
    outs = []
    for t in range(T):
        g = xg[:, t, :] + h @ params["whh"]
        i_g = jax.nn.sigmoid(g[:, 0 * H:1 * H])
        f_g = jax.nn.sigmoid(g[:, 1 * H:2 * H])
        g_g = jnp.tanh(g[:, 2 * H:3 * H])
        o_g = jax.nn.sigmoid(g[:, 3 * H:4 * H])
        c = f_g * c + i_g * g_g
        h = o_g * jnp.tanh(c)
        outs.append(h)
    hseq = jnp.stack(outs, axis=1)
    return jnp.einsum("bth,ho->bto", hseq, params["wfc"]) + params["bfc"]


def init_params(key):
    ks = jax.random.split(key, 10)
    u = lambda k, shape, s: jax.random.uniform(k, shape, jnp.float32, -s, s)
    return {
        # conv weights pre-fused host-side to (3*Cin, Cout); rows are the taps
        # stacked [x(t-1); x(t); x(t+1)] so no per-call weight reshape is needed.
        "w1": u(ks[0], (3 * INPUT_SIZE, OUT_CHANNELS), 0.3),
        "b1": u(ks[1], (1, OUT_CHANNELS), 0.3),
        "w2": u(ks[2], (3 * OUT_CHANNELS, C2), 0.2),
        "b2": u(ks[3], (1, C2), 0.2),
        # LSTM weights stored transposed: (in, 4H) / (H, 4H); gate order i,f,g,o
        "wih": u(ks[4], (C2, 4 * HIDDEN_SIZE), 0.15),
        "whh": u(ks[5], (HIDDEN_SIZE, 4 * HIDDEN_SIZE), 0.15),
        "blstm": u(ks[6], (1, 4 * HIDDEN_SIZE), 0.15),   # b_ih + b_hh combined
        # fc stored transposed: (H, O)
        "wfc": u(ks[7], (HIDDEN_SIZE, OUTPUT_SIZE), 0.2),
        "bfc": u(ks[8], (1, OUTPUT_SIZE), 0.2),
    }


if __name__ == "__main__":
    key = jax.random.PRNGKey(0)
    kx, kp = jax.random.split(key)
    x = jax.random.normal(kx, (BATCH, SEQ, INPUT_SIZE), jnp.float32)
    params = init_params(kp)

    out = jax.block_until_ready(cnn_lstm_forward(x, params))
    ref = ref_forward(x, params)

    assert out.shape == (BATCH, SEQ, OUTPUT_SIZE)
    assert jnp.allclose(out, ref, rtol=1e-4, atol=1e-4), (
        f"max abs err {jnp.max(jnp.abs(out - ref))}")
    print("KERNEL_OK")
</pallas_src>

<mosaic_0001>
module attributes {stable_mosaic.version = 11 : i64} {
  func.func @cnn_lstm_kernel(%arg0: i32, %arg1: memref<2x8x4xf32, #tpu.memory_space<vmem>>, %arg2: memref<12x8xf32, #tpu.memory_space<vmem>>, %arg3: memref<1x8xf32, #tpu.memory_space<vmem>>, %arg4: memref<24x16xf32, #tpu.memory_space<vmem>>, %arg5: memref<1x16xf32, #tpu.memory_space<vmem>>, %arg6: memref<16x128xf32, #tpu.memory_space<vmem>>, %arg7: memref<32x128xf32, #tpu.memory_space<vmem>>, %arg8: memref<1x128xf32, #tpu.memory_space<vmem>>, %arg9: memref<32x4xf32, #tpu.memory_space<vmem>>, %arg10: memref<1x4xf32, #tpu.memory_space<vmem>>, %arg11: memref<2x8x4xf32, #tpu.memory_space<vmem>>, %arg12: memref<2x10x4xf32, #tpu.memory_space<vmem>>, %arg13: memref<2x10x8xf32, #tpu.memory_space<vmem>>, %arg14: memref<2x8x128xf32, #tpu.memory_space<vmem>>, %arg15: memref<2x8x32xf32, #tpu.memory_space<vmem>>) attributes {dimension_semantics = [#tpu.dimension_semantics<arbitrary>], iteration_bounds = array<i64: 1>, scalar_prefetch = 0 : i64, scratch_operands = 4 : i64, tpu.core_type = #tpu.core_type<tc>, window_params = [{pipeline_mode = #tpu.pipeline_mode<synchronous>, transform_indices = @transform_0, window_bounds = array<i64: 2, 8, 4>}, {pipeline_mode = #tpu.pipeline_mode<synchronous>, transform_indices = @transform_1, window_bounds = array<i64: 12, 8>}, {pipeline_mode = #tpu.pipeline_mode<synchronous>, transform_indices = @transform_2, window_bounds = array<i64: 1, 8>}, {pipeline_mode = #tpu.pipeline_mode<synchronous>, transform_indices = @transform_3, window_bounds = array<i64: 24, 16>}, {pipeline_mode = #tpu.pipeline_mode<synchronous>, transform_indices = @transform_4, window_bounds = array<i64: 1, 16>}, {pipeline_mode = #tpu.pipeline_mode<synchronous>, transform_indices = @transform_5, window_bounds = array<i64: 16, 128>}, {pipeline_mode = #tpu.pipeline_mode<synchronous>, transform_indices = @transform_6, window_bounds = array<i64: 32, 128>}, {pipeline_mode = #tpu.pipeline_mode<synchronous>, transform_indices = @transform_7, window_bounds = array<i64: 1, 128>}, {pipeline_mode = #tpu.pipeline_mode<synchronous>, transform_indices = @transform_8, window_bounds = array<i64: 32, 4>}, {pipeline_mode = #tpu.pipeline_mode<synchronous>, transform_indices = @transform_9, window_bounds = array<i64: 1, 4>}, {pipeline_mode = #tpu.pipeline_mode<synchronous>, transform_indices = @transform_10, window_bounds = array<i64: 2, 8, 4>}]} {
    %c0 = arith.constant 0 : index
    %c0_0 = arith.constant 0 : index
    %c0_1 = arith.constant 0 : index
    %0 = vector.load %arg1[%c0, %c0_0, %c0_1] : memref<2x8x4xf32, #tpu.memory_space<vmem>>, vector<2x8x4xf32>
    %cst = arith.constant 0.000000e+00 : f32
    %1 = vector.broadcast %cst : f32 to vector<2x10x4xf32>
    %c0_2 = arith.constant 0 : index
    %c0_3 = arith.constant 0 : index
    %c0_4 = arith.constant 0 : index
    %2 = vector.load %arg12[%c0_2, %c0_3, %c0_4] : memref<2x10x4xf32, #tpu.memory_space<vmem>>, vector<2x10x4xf32>
    tpu.vector_store %arg12[%c0_2, %c0_3, %c0_4], %1 {strides = array<i32>} : memref<2x10x4xf32, #tpu.memory_space<vmem>>, vector<2x10x4xf32>,
    %c0_5 = arith.constant 0 : index
    %c1 = arith.constant 1 : index
    %c0_6 = arith.constant 0 : index
    %3 = vector.load %arg12[%c0_5, %c1, %c0_6] : memref<2x10x4xf32, #tpu.memory_space<vmem>>, vector<2x8x4xf32>
    tpu.vector_store %arg12[%c0_5, %c1, %c0_6], %0 {strides = array<i32>} : memref<2x10x4xf32, #tpu.memory_space<vmem>>, vector<2x8x4xf32>,
    %c0_7 = arith.constant 0 : index
    %c0_8 = arith.constant 0 : index
    %c0_9 = arith.constant 0 : index
    %4 = vector.load %arg12[%c0_7, %c0_8, %c0_9] : memref<2x10x4xf32, #tpu.memory_space<vmem>>, vector<2x8x4xf32>
    %5 = vector.shape_cast %4 : vector<2x8x4xf32> to vector<16x4xf32>
    %c0_10 = arith.constant 0 : index
    %c2 = arith.constant 2 : index
    %c0_11 = arith.constant 0 : index
    %6 = vector.load %arg12[%c0_10, %c2, %c0_11] : memref<2x10x4xf32, #tpu.memory_space<vmem>>, vector<2x8x4xf32>
    %7 = vector.shape_cast %6 : vector<2x8x4xf32> to vector<16x4xf32>
    %8 = vector.shape_cast %0 : vector<2x8x4xf32> to vector<16x4xf32>
    %9 = tpu.concatenate %5, %8, %7 in 1 : vector<16x4xf32>, vector<16x4xf32>, vector<16x4xf32> -> vector<16x12xf32>
    %c0_12 = arith.constant 0 : index
    %c0_13 = arith.constant 0 : index
    %10 = vector.load %arg2[%c0_12, %c0_13] : memref<12x8xf32, #tpu.memory_space<vmem>>, vector<12x8xf32>
    %cst_14 = arith.constant dense<0.000000e+00> : vector<16x8xf32>
    %11 = tpu.matmul %9, %10, %cst_14 {dimension_numbers = #tpu.dot_dimension_numbers<[1], [0], [0], [1], [0, 0, 1, 1], [], []>} : vector<16x12xf32>, vector<12x8xf32>, vector<16x8xf32> -> vector<16x8xf32>
    %c0_15 = arith.constant 0 : index
    %c0_16 = arith.constant 0 : index
    %12 = vector.load %arg3[%c0_15, %c0_16] : memref<1x8xf32, #tpu.memory_space<vmem>>, vector<1x8xf32>
    %13 = vector.broadcast %12 : vector<1x8xf32> to vector<16x8xf32>
    %14 = arith.addf %11, %13 : vector<16x8xf32>
    %cst_17 = arith.constant 0.000000e+00 : f32
    %15 = vector.broadcast %cst_17 : f32 to vector<16x8xf32>
    %16 = arith.maximumf %14, %15 : vector<16x8xf32>
    %cst_18 = arith.constant 0.000000e+00 : f32
    %17 = vector.broadcast %cst_18 : f32 to vector<2x10x8xf32>
    %c0_19 = arith.constant 0 : index
    %c0_20 = arith.constant 0 : index
    %c0_21 = arith.constant 0 : index
    %18 = vector.load %arg13[%c0_19, %c0_20, %c0_21] : memref<2x10x8xf32, #tpu.memory_space<vmem>>, vector<2x10x8xf32>
    tpu.vector_store %arg13[%c0_19, %c0_20, %c0_21], %17 {strides = array<i32>} : memref<2x10x8xf32, #tpu.memory_space<vmem>>, vector<2x10x8xf32>,
    %19 = vector.shape_cast %16 : vector<16x8xf32> to vector<2x8x8xf32>
    %c0_22 = arith.constant 0 : index
    %c1_23 = arith.constant 1 : index
    %c0_24 = arith.constant 0 : index
    %20 = vector.load %arg13[%c0_22, %c1_23, %c0_24] : memref<2x10x8xf32, #tpu.memory_space<vmem>>, vector<2x8x8xf32>
    tpu.vector_store %arg13[%c0_22, %c1_23, %c0_24], %19 {strides = array<i32>} : memref<2x10x8xf32, #tpu.memory_space<vmem>>, vector<2x8x8xf32>,
    %c0_25 = arith.constant 0 : index
    %c0_26 = arith.constant 0 : index
    %c0_27 = arith.constant 0 : index
    %21 = vector.load %arg13[%c0_25, %c0_26, %c0_27] : memref<2x10x8xf32, #tpu.memory_space<vmem>>, vector<2x8x8xf32>
    %22 = vector.shape_cast %21 : vector<2x8x8xf32> to vector<16x8xf32>
    %c0_28 = arith.constant 0 : index
    %c2_29 = arith.constant 2 : index
    %c0_30 = arith.constant 0 : index
    %23 = vector.load %arg13[%c0_28, %c2_29, %c0_30] : memref<2x10x8xf32, #tpu.memory_space<vmem>>, vector<2x8x8xf32>
    %24 = vector.shape_cast %23 : vector<2x8x8xf32> to vector<16x8xf32>
    %25 = tpu.concatenate %22, %16, %24 in 1 : vector<16x8xf32>, vector<16x8xf32>, vector<16x8xf32> -> vector<16x24xf32>
    %c0_31 = arith.constant 0 : index
    %c0_32 = arith.constant 0 : index
    %26 = vector.load %arg4[%c0_31, %c0_32] : memref<24x16xf32, #tpu.memory_space<vmem>>, vector<24x16xf32>
    %cst_33 = arith.constant dense<0.000000e+00> : vector<16x16xf32>
    %27 = tpu.matmul %25, %26, %cst_33 {dimension_numbers = #tpu.dot_dimension_numbers<[1], [0], [0], [1], [0, 0, 1, 1], [], []>} : vector<16x24xf32>, vector<24x16xf32>, vector<16x16xf32> -> vector<16x16xf32>
    %c0_34 = arith.constant 0 : index
    %c0_35 = arith.constant 0 : index
    %28 = vector.load %arg5[%c0_34, %c0_35] : memref<1x16xf32, #tpu.memory_space<vmem>>, vector<1x16xf32>
    %29 = vector.broadcast %28 : vector<1x16xf32> to vector<16x16xf32>
    %30 = arith.addf %27, %29 : vector<16x16xf32>
    %cst_36 = arith.constant 0.000000e+00 : f32
    %31 = vector.broadcast %cst_36 : f32 to vector<16x16xf32>
    %32 = arith.maximumf %30, %31 : vector<16x16xf32>
    %c0_37 = arith.constant 0 : index
    %c0_38 = arith.constant 0 : index
    %33 = vector.load %arg6[%c0_37, %c0_38] : memref<16x128xf32, #tpu.memory_space<vmem>>, vector<16x128xf32>
    %cst_39 = arith.constant dense<0.000000e+00> : vector<16x128xf32>
    %34 = tpu.matmul %32, %33, %cst_39 {dimension_numbers = #tpu.dot_dimension_numbers<[1], [0], [0], [1], [0, 0, 1, 1], [], []>} : vector<16x16xf32>, vector<16x128xf32>, vector<16x128xf32> -> vector<16x128xf32>
    %c0_40 = arith.constant 0 : index
    %c0_41 = arith.constant 0 : index
    %35 = vector.load %arg8[%c0_40, %c0_41] : memref<1x128xf32, #tpu.memory_space<vmem>>, vector<1x128xf32>
    %36 = vector.broadcast %35 : vector<1x128xf32> to vector<16x128xf32>
    %37 = arith.addf %34, %36 : vector<16x128xf32>
    %38 = vector.shape_cast %37 : vector<16x128xf32> to vector<2x8x128xf32>
    %c0_42 = arith.constant 0 : index
    %c0_43 = arith.constant 0 : index
    %c0_44 = arith.constant 0 : index
    %39 = vector.load %arg14[%c0_42, %c0_43, %c0_44] : memref<2x8x128xf32, #tpu.memory_space<vmem>>, vector<2x8x128xf32>
    tpu.vector_store %arg14[%c0_42, %c0_43, %c0_44], %38 {strides = array<i32>} : memref<2x8x128xf32, #tpu.memory_space<vmem>>, vector<2x8x128xf32>,
    %c0_45 = arith.constant 0 : index
    %c0_46 = arith.constant 0 : index
    %40 = vector.load %arg7[%c0_45, %c0_46] : memref<32x128xf32, #tpu.memory_space<vmem>>, vector<32x128xf32>
    %cst_47 = arith.constant 0.000000e+00 : f32
    %41 = vector.broadcast %cst_47 : f32 to vector<2x32xf32>
    %cst_48 = arith.constant 0.000000e+00 : f32
    %42 = vector.broadcast %cst_48 : f32 to vector<2x32xf32>
    %c0_49 = arith.constant 0 : index
    %c0_50 = arith.constant 0 : index
    %c0_51 = arith.constant 0 : index
    %43 = vector.load %arg14[%c0_49, %c0_50, %c0_51] : memref<2x8x128xf32, #tpu.memory_space<vmem>>, vector<2x1x128xf32>
    %44 = vector.shape_cast %43 : vector<2x1x128xf32> to vector<2x128xf32>
    %cst_52 = arith.constant dense<0.000000e+00> : vector<2x128xf32>
    %45 = tpu.matmul %41, %40, %cst_52 {dimension_numbers = #tpu.dot_dimension_numbers<[1], [0], [0], [1], [0, 0, 1, 1], [], []>} : vector<2x32xf32>, vector<32x128xf32>, vector<2x128xf32> -> vector<2x128xf32>
    %46 = arith.addf %44, %45 : vector<2x128xf32>
    %47 = arith.negf %46 : vector<2x128xf32>
    %48 = math.exp %47 : vector<2x128xf32>
    %cst_53 = arith.constant 1.000000e+00 : f32
    %49 = vector.broadcast %cst_53 : f32 to vector<2x128xf32>
    %50 = arith.addf %49, %48 : vector<2x128xf32>
    %51 = arith.divf %49, %50 : vector<2x128xf32>
    %52 = math.tanh %46 : vector<2x128xf32>
    %53 = vector.extract_strided_slice %51 {offsets = [0, 0], sizes = [2, 32], strides = [1, 1]} : vector<2x128xf32> to vector<2x32xf32>
    %54 = vector.extract_strided_slice %51 {offsets = [0, 32], sizes = [2, 32], strides = [1, 1]} : vector<2x128xf32> to vector<2x32xf32>
    %55 = vector.extract_strided_slice %52 {offsets = [0, 64], sizes = [2, 32], strides = [1, 1]} : vector<2x128xf32> to vector<2x32xf32>
    %56 = vector.extract_strided_slice %51 {offsets = [0, 96], sizes = [2, 32], strides = [1, 1]} : vector<2x128xf32> to vector<2x32xf32>
    %57 = arith.mulf %54, %42 : vector<2x32xf32>
    %58 = arith.mulf %53, %55 : vector<2x32xf32>
    %59 = arith.addf %57, %58 : vector<2x32xf32>
    %60 = math.tanh %59 : vector<2x32xf32>
    %61 = arith.mulf %56, %60 : vector<2x32xf32>
    %c0_54 = arith.constant 0 : index
    %c0_55 = arith.constant 0 : index
    %c0_56 = arith.constant 0 : index
    %62 = vector.load %arg15[%c0_54, %c0_55, %c0_56] : memref<2x8x32xf32, #tpu.memory_space<vmem>>, vector<2x1x32xf32>
    %63 = vector.shape_cast %62 : vector<2x1x32xf32> to vector<2x32xf32>
    %64 = vector.shape_cast %61 : vector<2x32xf32> to vector<2x1x32xf32>
    tpu.vector_store %arg15[%c0_54, %c0_55, %c0_56], %64 {strides = array<i32>} : memref<2x8x32xf32, #tpu.memory_space<vmem>>, vector<2x1x32xf32>,
    %c0_57 = arith.constant 0 : index
    %c1_58 = arith.constant 1 : index
    %c0_59 = arith.constant 0 : index
    %65 = vector.load %arg14[%c0_57, %c1_58, %c0_59] : memref<2x8x128xf32, #tpu.memory_space<vmem>>, vector<2x1x128xf32>
    %66 = vector.shape_cast %65 : vector<2x1x128xf32> to vector<2x128xf32>
    %cst_60 = arith.constant dense<0.000000e+00> : vector<2x128xf32>
    %67 = tpu.matmul %61, %40, %cst_60 {dimension_numbers = #tpu.dot_dimension_numbers<[1], [0], [0], [1], [0, 0, 1, 1], [], []>} : vector<2x32xf32>, vector<32x128xf32>, vector<2x128xf32> -> vector<2x128xf32>
    %68 = arith.addf %66, %67 : vector<2x128xf32>
    %69 = arith.negf %68 : vector<2x128xf32>
    %70 = math.exp %69 : vector<2x128xf32>
    %cst_61 = arith.constant 1.000000e+00 : f32
    %71 = vector.broadcast %cst_61 : f32 to vector<2x128xf32>
    %72 = arith.addf %71, %70 : vector<2x128xf32>
    %73 = arith.divf %71, %72 : vector<2x128xf32>
    %74 = math.tanh %68 : vector<2x128xf32>
    %75 = vector.extract_strided_slice %73 {offsets = [0, 0], sizes = [2, 32], strides = [1, 1]} : vector<2x128xf32> to vector<2x32xf32>
    %76 = vector.extract_strided_slice %73 {offsets = [0, 32], sizes = [2, 32], strides = [1, 1]} : vector<2x128xf32> to vector<2x32xf32>
    %77 = vector.extract_strided_slice %74 {offsets = [0, 64], sizes = [2, 32], strides = [1, 1]} : vector<2x128xf32> to vector<2x32xf32>
    %78 = vector.extract_strided_slice %73 {offsets = [0, 96], sizes = [2, 32], strides = [1, 1]} : vector<2x128xf32> to vector<2x32xf32>
    %79 = arith.mulf %76, %59 : vector<2x32xf32>
    %80 = arith.mulf %75, %77 : vector<2x32xf32>
    %81 = arith.addf %79, %80 : vector<2x32xf32>
    %82 = math.tanh %81 : vector<2x32xf32>
    %83 = arith.mulf %78, %82 : vector<2x32xf32>
    %c0_62 = arith.constant 0 : index
    %c1_63 = arith.constant 1 : index
    %c0_64 = arith.constant 0 : index
    %84 = vector.load %arg15[%c0_62, %c1_63, %c0_64] : memref<2x8x32xf32, #tpu.memory_space<vmem>>, vector<2x1x32xf32>
    %85 = vector.shape_cast %84 : vector<2x1x32xf32> to vector<2x32xf32>
    %86 = vector.shape_cast %83 : vector<2x32xf32> to vector<2x1x32xf32>
    tpu.vector_store %arg15[%c0_62, %c1_63, %c0_64], %86 {strides = array<i32>} : memref<2x8x32xf32, #tpu.memory_space<vmem>>, vector<2x1x32xf32>,
    %c0_65 = arith.constant 0 : index
    %c2_66 = arith.constant 2 : index
    %c0_67 = arith.constant 0 : index
    %87 = vector.load %arg14[%c0_65, %c2_66, %c0_67] : memref<2x8x128xf32, #tpu.memory_space<vmem>>, vector<2x1x128xf32>
    %88 = vector.shape_cast %87 : vector<2x1x128xf32> to vector<2x128xf32>
    %cst_68 = arith.constant dense<0.000000e+00> : vector<2x128xf32>
    %89 = tpu.matmul %83, %40, %cst_68 {dimension_numbers = #tpu.dot_dimension_numbers<[1], [0], [0], [1], [0, 0, 1, 1], [], []>} : vector<2x32xf32>, vector<32x128xf32>, vector<2x128xf32> -> vector<2x128xf32>
    %90 = arith.addf %88, %89 : vector<2x128xf32>
    %91 = arith.negf %90 : vector<2x128xf32>
    %92 = math.exp %91 : vector<2x128xf32>
    %cst_69 = arith.constant 1.000000e+00 : f32
    %93 = vector.broadcast %cst_69 : f32 to vector<2x128xf32>
    %94 = arith.addf %93, %92 : vector<2x128xf32>
    %95 = arith.divf %93, %94 : vector<2x128xf32>
    %96 = math.tanh %90 : vector<2x128xf32>
    %97 = vector.extract_strided_slice %95 {offsets = [0, 0], sizes = [2, 32], strides = [1, 1]} : vector<2x128xf32> to vector<2x32xf32>
    %98 = vector.extract_strided_slice %95 {offsets = [0, 32], sizes = [2, 32], strides = [1, 1]} : vector<2x128xf32> to vector<2x32xf32>
    %99 = vector.extract_strided_slice %96 {offsets = [0, 64], sizes = [2, 32], strides = [1, 1]} : vector<2x128xf32> to vector<2x32xf32>
    %100 = vector.extract_strided_slice %95 {offsets = [0, 96], sizes = [2, 32], strides = [1, 1]} : vector<2x128xf32> to vector<2x32xf32>
    %101 = arith.mulf %98, %81 : vector<2x32xf32>
    %102 = arith.mulf %97, %99 : vector<2x32xf32>
    %103 = arith.addf %101, %102 : vector<2x32xf32>
    %104 = math.tanh %103 : vector<2x32xf32>
    %105 = arith.mulf %100, %104 : vector<2x32xf32>
    %c0_70 = arith.constant 0 : index
    %c2_71 = arith.constant 2 : index
    %c0_72 = arith.constant 0 : index
    %106 = vector.load %arg15[%c0_70, %c2_71, %c0_72] : memref<2x8x32xf32, #tpu.memory_space<vmem>>, vector<2x1x32xf32>
    %107 = vector.shape_cast %106 : vector<2x1x32xf32> to vector<2x32xf32>
    %108 = vector.shape_cast %105 : vector<2x32xf32> to vector<2x1x32xf32>
    tpu.vector_store %arg15[%c0_70, %c2_71, %c0_72], %108 {strides = array<i32>} : memref<2x8x32xf32, #tpu.memory_space<vmem>>, vector<2x1x32xf32>,
    %c0_73 = arith.constant 0 : index
    %c3 = arith.constant 3 : index
    %c0_74 = arith.constant 0 : index
    %109 = vector.load %arg14[%c0_73, %c3, %c0_74] : memref<2x8x128xf32, #tpu.memory_space<vmem>>, vector<2x1x128xf32>
    %110 = vector.shape_cast %109 : vector<2x1x128xf32> to vector<2x128xf32>
    %cst_75 = arith.constant dense<0.000000e+00> : vector<2x128xf32>
    %111 = tpu.matmul %105, %40, %cst_75 {dimension_numbers = #tpu.dot_dimension_numbers<[1], [0], [0], [1], [0, 0, 1, 1], [], []>} : vector<2x32xf32>, vector<32x128xf32>, vector<2x128xf32> -> vector<2x128xf32>
    %112 = arith.addf %110, %111 : vector<2x128xf32>
    %113 = arith.negf %112 : vector<2x128xf32>
    %114 = math.exp %113 : vector<2x128xf32>
    %cst_76 = arith.constant 1.000000e+00 : f32
    %115 = vector.broadcast %cst_76 : f32 to vector<2x128xf32>
    %116 = arith.addf %115, %114 : vector<2x128xf32>
    %117 = arith.divf %115, %116 : vector<2x128xf32>
    %118 = math.tanh %112 : vector<2x128xf32>
    %119 = vector.extract_strided_slice %117 {offsets = [0, 0], sizes = [2, 32], strides = [1, 1]} : vector<2x128xf32> to vector<2x32xf32>
    %120 = vector.extract_strided_slice %117 {offsets = [0, 32], sizes = [2, 32], strides = [1, 1]} : vector<2x128xf32> to vector<2x32xf32>
    %121 = vector.extract_strided_slice %118 {offsets = [0, 64], sizes = [2, 32], strides = [1, 1]} : vector<2x128xf32> to vector<2x32xf32>
    %122 = vector.extract_strided_slice %117 {offsets = [0, 96], sizes = [2, 32], strides = [1, 1]} : vector<2x128xf32> to vector<2x32xf32>
    %123 = arith.mulf %120, %103 : vector<2x32xf32>
    %124 = arith.mulf %119, %121 : vector<2x32xf32>
    %125 = arith.addf %123, %124 : vector<2x32xf32>
    %126 = math.tanh %125 : vector<2x32xf32>
    %127 = arith.mulf %122, %126 : vector<2x32xf32>
    %c0_77 = arith.constant 0 : index
    %c3_78 = arith.constant 3 : index
    %c0_79 = arith.constant 0 : index
    %128 = vector.load %arg15[%c0_77, %c3_78, %c0_79] : memref<2x8x32xf32, #tpu.memory_space<vmem>>, vector<2x1x32xf32>
    %129 = vector.shape_cast %128 : vector<2x1x32xf32> to vector<2x32xf32>
    %130 = vector.shape_cast %127 : vector<2x32xf32> to vector<2x1x32xf32>
    tpu.vector_store %arg15[%c0_77, %c3_78, %c0_79], %130 {strides = array<i32>} : memref<2x8x32xf32, #tpu.memory_space<vmem>>, vector<2x1x32xf32>,
    %c0_80 = arith.constant 0 : index
    %c4 = arith.constant 4 : index
    %c0_81 = arith.constant 0 : index
    %131 = vector.load %arg14[%c0_80, %c4, %c0_81] : memref<2x8x128xf32, #tpu.memory_space<vmem>>, vector<2x1x128xf32>
    %132 = vector.shape_cast %131 : vector<2x1x128xf32> to vector<2x128xf32>
    %cst_82 = arith.constant dense<0.000000e+00> : vector<2x128xf32>
    %133 = tpu.matmul %127, %40, %cst_82 {dimension_numbers = #tpu.dot_dimension_numbers<[1], [0], [0], [1], [0, 0, 1, 1], [], []>} : vector<2x32xf32>, vector<32x128xf32>, vector<2x128xf32> -> vector<2x128xf32>
    %134 = arith.addf %132, %133 : vector<2x128xf32>
    %135 = arith.negf %134 : vector<2x128xf32>
    %136 = math.exp %135 : vector<2x128xf32>
    %cst_83 = arith.constant 1.000000e+00 : f32
    %137 = vector.broadcast %cst_83 : f32 to vector<2x128xf32>
    %138 = arith.addf %137, %136 : vector<2x128xf32>
    %139 = arith.divf %137, %138 : vector<2x128xf32>
    %140 = math.tanh %134 : vector<2x128xf32>
    %141 = vector.extract_strided_slice %139 {offsets = [0, 0], sizes = [2, 32], strides = [1, 1]} : vector<2x128xf32> to vector<2x32xf32>
    %142 = vector.extract_strided_slice %139 {offsets = [0, 32], sizes = [2, 32], strides = [1, 1]} : vector<2x128xf32> to vector<2x32xf32>
    %143 = vector.extract_strided_slice %140 {offsets = [0, 64], sizes = [2, 32], strides = [1, 1]} : vector<2x128xf32> to vector<2x32xf32>
    %144 = vector.extract_strided_slice %139 {offsets = [0, 96], sizes = [2, 32], strides = [1, 1]} : vector<2x128xf32> to vector<2x32xf32>
    %145 = arith.mulf %142, %125 : vector<2x32xf32>
    %146 = arith.mulf %141, %143 : vector<2x32xf32>
    %147 = arith.addf %145, %146 : vector<2x32xf32>
    %148 = math.tanh %147 : vector<2x32xf32>
    %149 = arith.mulf %144, %148 : vector<2x32xf32>
    %c0_84 = arith.constant 0 : index
    %c4_85 = arith.constant 4 : index
    %c0_86 = arith.constant 0 : index
    %150 = vector.load %arg15[%c0_84, %c4_85, %c0_86] : memref<2x8x32xf32, #tpu.memory_space<vmem>>, vector<2x1x32xf32>
    %151 = vector.shape_cast %150 : vector<2x1x32xf32> to vector<2x32xf32>
    %152 = vector.shape_cast %149 : vector<2x32xf32> to vector<2x1x32xf32>
    tpu.vector_store %arg15[%c0_84, %c4_85, %c0_86], %152 {strides = array<i32>} : memref<2x8x32xf32, #tpu.memory_space<vmem>>, vector<2x1x32xf32>,
    %c0_87 = arith.constant 0 : index
    %c5 = arith.constant 5 : index
    %c0_88 = arith.constant 0 : index
    %153 = vector.load %arg14[%c0_87, %c5, %c0_88] : memref<2x8x128xf32, #tpu.memory_space<vmem>>, vector<2x1x128xf32>
    %154 = vector.shape_cast %153 : vector<2x1x128xf32> to vector<2x128xf32>
    %cst_89 = arith.constant dense<0.000000e+00> : vector<2x128xf32>
    %155 = tpu.matmul %149, %40, %cst_89 {dimension_numbers = #tpu.dot_dimension_numbers<[1], [0], [0], [1], [0, 0, 1, 1], [], []>} : vector<2x32xf32>, vector<32x128xf32>, vector<2x128xf32> -> vector<2x128xf32>
    %156 = arith.addf %154, %155 : vector<2x128xf32>
    %157 = arith.negf %156 : vector<2x128xf32>
    %158 = math.exp %157 : vector<2x128xf32>
    %cst_90 = arith.constant 1.000000e+00 : f32
    %159 = vector.broadcast %cst_90 : f32 to vector<2x128xf32>
    %160 = arith.addf %159, %158 : vector<2x128xf32>
    %161 = arith.divf %159, %160 : vector<2x128xf32>
    %162 = math.tanh %156 : vector<2x128xf32>
    %163 = vector.extract_strided_slice %161 {offsets = [0, 0], sizes = [2, 32], strides = [1, 1]} : vector<2x128xf32> to vector<2x32xf32>
    %164 = vector.extract_strided_slice %161 {offsets = [0, 32], sizes = [2, 32], strides = [1, 1]} : vector<2x128xf32> to vector<2x32xf32>
    %165 = vector.extract_strided_slice %162 {offsets = [0, 64], sizes = [2, 32], strides = [1, 1]} : vector<2x128xf32> to vector<2x32xf32>
    %166 = vector.extract_strided_slice %161 {offsets = [0, 96], sizes = [2, 32], strides = [1, 1]} : vector<2x128xf32> to vector<2x32xf32>
    %167 = arith.mulf %164, %147 : vector<2x32xf32>
    %168 = arith.mulf %163, %165 : vector<2x32xf32>
    %169 = arith.addf %167, %168 : vector<2x32xf32>
    %170 = math.tanh %169 : vector<2x32xf32>
    %171 = arith.mulf %166, %170 : vector<2x32xf32>
    %c0_91 = arith.constant 0 : index
    %c5_92 = arith.constant 5 : index
    %c0_93 = arith.constant 0 : index
    %172 = vector.load %arg15[%c0_91, %c5_92, %c0_93] : memref<2x8x32xf32, #tpu.memory_space<vmem>>, vector<2x1x32xf32>
    %173 = vector.shape_cast %172 : vector<2x1x32xf32> to vector<2x32xf32>
    %174 = vector.shape_cast %171 : vector<2x32xf32> to vector<2x1x32xf32>
    tpu.vector_store %arg15[%c0_91, %c5_92, %c0_93], %174 {strides = array<i32>} : memref<2x8x32xf32, #tpu.memory_space<vmem>>, vector<2x1x32xf32>,
    %c0_94 = arith.constant 0 : index
    %c6 = arith.constant 6 : index
    %c0_95 = arith.constant 0 : index
    %175 = vector.load %arg14[%c0_94, %c6, %c0_95] : memref<2x8x128xf32, #tpu.memory_space<vmem>>, vector<2x1x128xf32>
    %176 = vector.shape_cast %175 : vector<2x1x128xf32> to vector<2x128xf32>
    %cst_96 = arith.constant dense<0.000000e+00> : vector<2x128xf32>
    %177 = tpu.matmul %171, %40, %cst_96 {dimension_numbers = #tpu.dot_dimension_numbers<[1], [0], [0], [1], [0, 0, 1, 1], [], []>} : vector<2x32xf32>, vector<32x128xf32>, vector<2x128xf32> -> vector<2x128xf32>
    %178 = arith.addf %176, %177 : vector<2x128xf32>
    %179 = arith.negf %178 : vector<2x128xf32>
    %180 = math.exp %179 : vector<2x128xf32>
    %cst_97 = arith.constant 1.000000e+00 : f32
    %181 = vector.broadcast %cst_97 : f32 to vector<2x128xf32>
    %182 = arith.addf %181, %180 : vector<2x128xf32>
    %183 = arith.divf %181, %182 : vector<2x128xf32>
    %184 = math.tanh %178 : vector<2x128xf32>
    %185 = vector.extract_strided_slice %183 {offsets = [0, 0], sizes = [2, 32], strides = [1, 1]} : vector<2x128xf32> to vector<2x32xf32>
    %186 = vector.extract_strided_slice %183 {offsets = [0, 32], sizes = [2, 32], strides = [1, 1]} : vector<2x128xf32> to vector<2x32xf32>
    %187 = vector.extract_strided_slice %184 {offsets = [0, 64], sizes = [2, 32], strides = [1, 1]} : vector<2x128xf32> to vector<2x32xf32>
    %188 = vector.extract_strided_slice %183 {offsets = [0, 96], sizes = [2, 32], strides = [1, 1]} : vector<2x128xf32> to vector<2x32xf32>
    %189 = arith.mulf %186, %169 : vector<2x32xf32>
    %190 = arith.mulf %185, %187 : vector<2x32xf32>
    %191 = arith.addf %189, %190 : vector<2x32xf32>
    %192 = math.tanh %191 : vector<2x32xf32>
    %193 = arith.mulf %188, %192 : vector<2x32xf32>
    %c0_98 = arith.constant 0 : index
    %c6_99 = arith.constant 6 : index
    %c0_100 = arith.constant 0 : index
    %194 = vector.load %arg15[%c0_98, %c6_99, %c0_100] : memref<2x8x32xf32, #tpu.memory_space<vmem>>, vector<2x1x32xf32>
    %195 = vector.shape_cast %194 : vector<2x1x32xf32> to vector<2x32xf32>
    %196 = vector.shape_cast %193 : vector<2x32xf32> to vector<2x1x32xf32>
    tpu.vector_store %arg15[%c0_98, %c6_99, %c0_100], %196 {strides = array<i32>} : memref<2x8x32xf32, #tpu.memory_space<vmem>>, vector<2x1x32xf32>,
    %c0_101 = arith.constant 0 : index
    %c7 = arith.constant 7 : index
    %c0_102 = arith.constant 0 : index
    %197 = vector.load %arg14[%c0_101, %c7, %c0_102] : memref<2x8x128xf32, #tpu.memory_space<vmem>>, vector<2x1x128xf32>
    %198 = vector.shape_cast %197 : vector<2x1x128xf32> to vector<2x128xf32>
    %cst_103 = arith.constant dense<0.000000e+00> : vector<2x128xf32>
    %199 = tpu.matmul %193, %40, %cst_103 {dimension_numbers = #tpu.dot_dimension_numbers<[1], [0], [0], [1], [0, 0, 1, 1], [], []>} : vector<2x32xf32>, vector<32x128xf32>, vector<2x128xf32> -> vector<2x128xf32>
    %200 = arith.addf %198, %199 : vector<2x128xf32>
    %201 = arith.negf %200 : vector<2x128xf32>
    %202 = math.exp %201 : vector<2x128xf32>
    %cst_104 = arith.constant 1.000000e+00 : f32
    %203 = vector.broadcast %cst_104 : f32 to vector<2x128xf32>
    %204 = arith.addf %203, %202 : vector<2x128xf32>
    %205 = arith.divf %203, %204 : vector<2x128xf32>
    %206 = math.tanh %200 : vector<2x128xf32>
    %207 = vector.extract_strided_slice %205 {offsets = [0, 0], sizes = [2, 32], strides = [1, 1]} : vector<2x128xf32> to vector<2x32xf32>
    %208 = vector.extract_strided_slice %205 {offsets = [0, 32], sizes = [2, 32], strides = [1, 1]} : vector<2x128xf32> to vector<2x32xf32>
    %209 = vector.extract_strided_slice %206 {offsets = [0, 64], sizes = [2, 32], strides = [1, 1]} : vector<2x128xf32> to vector<2x32xf32>
    %210 = vector.extract_strided_slice %205 {offsets = [0, 96], sizes = [2, 32], strides = [1, 1]} : vector<2x128xf32> to vector<2x32xf32>
    %211 = arith.mulf %208, %191 : vector<2x32xf32>
    %212 = arith.mulf %207, %209 : vector<2x32xf32>
    %213 = arith.addf %211, %212 : vector<2x32xf32>
    %214 = math.tanh %213 : vector<2x32xf32>
    %215 = arith.mulf %210, %214 : vector<2x32xf32>
    %c0_105 = arith.constant 0 : index
    %c7_106 = arith.constant 7 : index
    %c0_107 = arith.constant 0 : index
    %216 = vector.load %arg15[%c0_105, %c7_106, %c0_107] : memref<2x8x32xf32, #tpu.memory_space<vmem>>, vector<2x1x32xf32>
    %217 = vector.shape_cast %216 : vector<2x1x32xf32> to vector<2x32xf32>
    %218 = vector.shape_cast %215 : vector<2x32xf32> to vector<2x1x32xf32>
    tpu.vector_store %arg15[%c0_105, %c7_106, %c0_107], %218 {strides = array<i32>} : memref<2x8x32xf32, #tpu.memory_space<vmem>>, vector<2x1x32xf32>,
    %c0_108 = arith.constant 0 : index
    %c0_109 = arith.constant 0 : index
    %c0_110 = arith.constant 0 : index
    %219 = vector.load %arg15[%c0_108, %c0_109, %c0_110] : memref<2x8x32xf32, #tpu.memory_space<vmem>>, vector<2x8x32xf32>
    %220 = vector.shape_cast %219 : vector<2x8x32xf32> to vector<16x32xf32>
    %c0_111 = arith.constant 0 : index
    %c0_112 = arith.constant 0 : index
    %221 = vector.load %arg9[%c0_111, %c0_112] : memref<32x4xf32, #tpu.memory_space<vmem>>, vector<32x4xf32>
    %cst_113 = arith.constant dense<0.000000e+00> : vector<16x4xf32>
    %222 = tpu.matmul %220, %221, %cst_113 {dimension_numbers = #tpu.dot_dimension_numbers<[1], [0], [0], [1], [0, 0, 1, 1], [], []>} : vector<16x32xf32>, vector<32x4xf32>, vector<16x4xf32> -> vector<16x4xf32>
    %c0_114 = arith.constant 0 : index
    %c0_115 = arith.constant 0 : index
    %223 = vector.load %arg10[%c0_114, %c0_115] : memref<1x4xf32, #tpu.memory_space<vmem>>, vector<1x4xf32>
    %224 = vector.broadcast %223 : vector<1x4xf32> to vector<16x4xf32>
    %225 = arith.addf %222, %224 : vector<16x4xf32>
    %226 = vector.shape_cast %225 : vector<16x4xf32> to vector<2x8x4xf32>
    %c0_116 = arith.constant 0 : index
    %c0_117 = arith.constant 0 : index
    %c0_118 = arith.constant 0 : index
    %227 = vector.load %arg11[%c0_116, %c0_117, %c0_118] : memref<2x8x4xf32, #tpu.memory_space<vmem>>, vector<2x8x4xf32>
    tpu.vector_store %arg11[%c0_116, %c0_117, %c0_118], %226 {strides = array<i32>} : memref<2x8x4xf32, #tpu.memory_space<vmem>>, vector<2x8x4xf32>,
    return
  }
  func.func @transform_0(%arg0: i32) -> (i32, i32, i32) {
    %c0_i32 = arith.constant 0 : i32
    %c0_i32_0 = arith.constant 0 : i32
    %c0_i32_1 = arith.constant 0 : i32
    %c0_i32_2 = arith.constant 0 : i32
    return %c0_i32, %c0_i32_0, %c0_i32_1 : i32, i32, i32
  }
  func.func @transform_1(%arg0: i32) -> (i32, i32) {
    %c0_i32 = arith.constant 0 : i32
    %c0_i32_0 = arith.constant 0 : i32
    %c0_i32_1 = arith.constant 0 : i32
    return %c0_i32, %c0_i32_0 : i32, i32
  }
  func.func @transform_2(%arg0: i32) -> (i32, i32) {
    %c0_i32 = arith.constant 0 : i32
    %c0_i32_0 = arith.constant 0 : i32
    %c0_i32_1 = arith.constant 0 : i32
    return %c0_i32, %c0_i32_0 : i32, i32
  }
  func.func @transform_3(%arg0: i32) -> (i32, i32) {
    %c0_i32 = arith.constant 0 : i32
    %c0_i32_0 = arith.constant 0 : i32
    %c0_i32_1 = arith.constant 0 : i32
    return %c0_i32, %c0_i32_0 : i32, i32
  }
  func.func @transform_4(%arg0: i32) -> (i32, i32) {
    %c0_i32 = arith.constant 0 : i32
    %c0_i32_0 = arith.constant 0 : i32
    %c0_i32_1 = arith.constant 0 : i32
    return %c0_i32, %c0_i32_0 : i32, i32
  }
  func.func @transform_5(%arg0: i32) -> (i32, i32) {
    %c0_i32 = arith.constant 0 : i32
    %c0_i32_0 = arith.constant 0 : i32
    %c0_i32_1 = arith.constant 0 : i32
    return %c0_i32, %c0_i32_0 : i32, i32
  }
  func.func @transform_6(%arg0: i32) -> (i32, i32) {
    %c0_i32 = arith.constant 0 : i32
    %c0_i32_0 = arith.constant 0 : i32
    %c0_i32_1 = arith.constant 0 : i32
    return %c0_i32, %c0_i32_0 : i32, i32
  }
  func.func @transform_7(%arg0: i32) -> (i32, i32) {
    %c0_i32 = arith.constant 0 : i32
    %c0_i32_0 = arith.constant 0 : i32
    %c0_i32_1 = arith.constant 0 : i32
    return %c0_i32, %c0_i32_0 : i32, i32
  }
  func.func @transform_8(%arg0: i32) -> (i32, i32) {
    %c0_i32 = arith.constant 0 : i32
    %c0_i32_0 = arith.constant 0 : i32
    %c0_i32_1 = arith.constant 0 : i32
    return %c0_i32, %c0_i32_0 : i32, i32
  }
  func.func @transform_9(%arg0: i32) -> (i32, i32) {
    %c0_i32 = arith.constant 0 : i32
    %c0_i32_0 = arith.constant 0 : i32
    %c0_i32_1 = arith.constant 0 : i32
    return %c0_i32, %c0_i32_0 : i32, i32
  }
  func.func @transform_10(%arg0: i32) -> (i32, i32, i32) {
    %c0_i32 = arith.constant 0 : i32
    %c0_i32_0 = arith.constant 0 : i32
    %c0_i32_1 = arith.constant 0 : i32
    %c0_i32_2 = arith.constant 0 : i32
    return %c0_i32, %c0_i32_0, %c0_i32_1 : i32, i32, i32
  }
}

</mosaic_0001>

<llo_original>
// kernel: tpu_custom_call.1
$region0: #{tpu_custom_call.1}
  #allocation0 [shape = 'u32[]', space=smem, size = 0x4, offset = 0x4, fixed_abs, tag = 'smem constant byte address 0x4 - core index']
  #allocation1 [shape = 'u32[144,128]{1,0:T(1,128)}', space=vmem, size = 0x12000, scoped, tag = 'internal scratch']
  #allocation2 [shape = 'f32[2,10,4]{2,1,0:T(8,128)}', space=vmem, size = 0x4000, scoped, tag = 'scratch operand']
  #allocation3 [shape = 'f32[2,10,8]{2,1,0:T(8,128)}', space=vmem, size = 0x4000, scoped, tag = 'scratch operand']
  #allocation4 [shape = 'f32[2,8,128]{2,1,0:T(8,128)}', space=vmem, size = 0x2000, scoped, tag = 'scratch operand']
  #allocation5 [shape = 'f32[2,8,32]{2,1,0:T(8,128)}', space=vmem, size = 0x2000, scoped, tag = 'scratch operand']
  %s0 = inlined_call_operand.vmem [shape: f32[2,8,4], index: 0, kind: input, shape index: {}]
  %s1 = inlined_call_operand.vmem [shape: f32[12,8], index: 1, kind: input, shape index: {}]
  %s2 = inlined_call_operand.vmem [shape: f32[1,8], index: 2, kind: input, shape index: {}]
  %s3 = inlined_call_operand.vmem [shape: f32[24,16], index: 3, kind: input, shape index: {}]
  %s4 = inlined_call_operand.vmem [shape: f32[1,16], index: 4, kind: input, shape index: {}]
  %s5 = inlined_call_operand.vmem [shape: f32[16,128], index: 5, kind: input, shape index: {}]
  %s6 = inlined_call_operand.vmem [shape: f32[32,128], index: 6, kind: input, shape index: {}]
  %s7 = inlined_call_operand.vmem [shape: f32[1,128], index: 7, kind: input, shape index: {}]
  %s8 = inlined_call_operand.vmem [shape: f32[32,4], index: 8, kind: input, shape index: {}]
  %s9 = inlined_call_operand.vmem [shape: f32[1,4], index: 9, kind: input, shape index: {}]
  %s10 = inlined_call_operand.vmem [shape: f32[2,8,4], index: 10, kind: output, shape index: {}]
  %s11 = sld [smem:[#allocation0]]
  $region50: #{tpu_custom_call.1} parent=0
    _
  %s13 = ssub.s32 1, %s11
  %s14 = scalar_select 0, %s13, %s11
  // Predicated region
  $region2: #{tpu_custom_call.1} parent=0 // pred_check
    _
  $region3: #{tpu_custom_call.1} parent=0 // pred_check_branch
    %16 = sbr.rel (0) target = $region5
  $region4: #{tpu_custom_call.1} parent=0 // pred_region
    _
  $region5: #{tpu_custom_call.1} parent=0 // pred_fallthru
    _
  // Predicated region
  $region6: #{tpu_custom_call.1} parent=0 // pred_check
    _
  $region7: #{tpu_custom_call.1} parent=0 // pred_check_branch
    %18 = sbr.rel (0) target = $region9
  $region8: #{tpu_custom_call.1} parent=0 // pred_region
    _
  $region9: #{tpu_custom_call.1} parent=0 // pred_fallthru
    _
  // Predicated region
  $region10: #{tpu_custom_call.1} parent=0 // pred_check
    _
  $region11: #{tpu_custom_call.1} parent=0 // pred_check_branch
    %20 = sbr.rel (0) target = $region13
  $region12: #{tpu_custom_call.1} parent=0 // pred_region
    _
  $region13: #{tpu_custom_call.1} parent=0 // pred_fallthru
    _
  // Predicated region
  $region14: #{tpu_custom_call.1} parent=0 // pred_check
    _
  $region15: #{tpu_custom_call.1} parent=0 // pred_check_branch
    %22 = sbr.rel (0) target = $region17
  $region16: #{tpu_custom_call.1} parent=0 // pred_region
    _
  $region17: #{tpu_custom_call.1} parent=0 // pred_fallthru
    _
  // Predicated region
  $region18: #{tpu_custom_call.1} parent=0 // pred_check
    _
  $region19: #{tpu_custom_call.1} parent=0 // pred_check_branch
    %24 = sbr.rel (0) target = $region21
  $region20: #{tpu_custom_call.1} parent=0 // pred_region
    _
  $region21: #{tpu_custom_call.1} parent=0 // pred_fallthru
    _
  // Predicated region
  $region22: #{tpu_custom_call.1} parent=0 // pred_check
    _
  $region23: #{tpu_custom_call.1} parent=0 // pred_check_branch
    %26 = sbr.rel (0) target = $region25
  $region24: #{tpu_custom_call.1} parent=0 // pred_region
    _
  $region25: #{tpu_custom_call.1} parent=0 // pred_fallthru
    _
  // Predicated region
  $region26: #{tpu_custom_call.1} parent=0 // pred_check
    _
  $region27: #{tpu_custom_call.1} parent=0 // pred_check_branch
    %28 = sbr.rel (0) target = $region29
  $region28: #{tpu_custom_call.1} parent=0 // pred_region
    _
  $region29: #{tpu_custom_call.1} parent=0 // pred_fallthru
    _
  // Predicated region
  $region30: #{tpu_custom_call.1} parent=0 // pred_check
    _
  $region31: #{tpu_custom_call.1} parent=0 // pred_check_branch
    %30 = sbr.rel (0) target = $region33
  $region32: #{tpu_custom_call.1} parent=0 // pred_region
    _
  $region33: #{tpu_custom_call.1} parent=0 // pred_fallthru
    _
  // Predicated region
  $region34: #{tpu_custom_call.1} parent=0 // pred_check
    _
  $region35: #{tpu_custom_call.1} parent=0 // pred_check_branch
    %32 = sbr.rel (0) target = $region37
  $region36: #{tpu_custom_call.1} parent=0 // pred_region
    _
  $region37: #{tpu_custom_call.1} parent=0 // pred_fallthru
    _
  // Predicated region
  $region38: #{tpu_custom_call.1} parent=0 // pred_check
    _
  $region39: #{tpu_custom_call.1} parent=0 // pred_check_branch
    %34 = sbr.rel (0) target = $region41
  $region40: #{tpu_custom_call.1} parent=0 // pred_region
    _
  $region41: #{tpu_custom_call.1} parent=0 // pred_fallthru
    _
  %v35 = vld [vmem:[%s0] sm:$0xff]
  %v36 = vld [vmem:[%s0 + $0x8] sm:$0xff]
  %vm37 = vcmask 31744
  %38 = vst.msk [vmem:[#allocation2] sm:$0xff] %vm37, 0.0
  %vm39 = vcmask 25600
  %40 = vst.msk [vmem:[#allocation2 + $0x8] sm:$0x3] %vm39, 0.0
  %41 = vst.msk [vmem:[#allocation2 + $0x10] sm:$0xff] %vm37, 0.0
  %42 = vst.msk [vmem:[#allocation2 + $0x18] sm:$0x3] %vm39, 0.0
  %43 = vst.msk [vmem:[#allocation2 + $0x1] sm:$0xff] %vm37, %v35
  %44 = vst.msk [vmem:[#allocation2 + $0x11] sm:$0xff] %vm37, %v36
  %v45 = vld [vmem:[#allocation2] sm:$0xff]
  %v46 = vld [vmem:[#allocation2 + $0x10] sm:$0xff]
  %v47 = vld [vmem:[#allocation2 + $0x2] sm:$0xff]
  %v48 = vld [vmem:[#allocation2 + $0x12] sm:$0xff]
  %51 = vrot.lane.b32.xlu0 %v35, 4
  %v52 = vpop.permute.xlu0 %51
  %53 = vrot.lane.b32.xlu0 %v36, 4
  %v54 = vpop.permute.xlu0 %53
  %59 = vrot.lane.b32.xlu0 %v47, 8
  %v60 = vpop.permute.xlu0 %59
  %61 = vrot.lane.b32.xlu0 %v48, 8
  %v62 = vpop.permute.xlu0 %61
  %v65 = vsel %vm37, %v45, %v52
  %v66 = vsel %vm37, %v46, %v54
  %vm67 = vcmask 64512
  %v68 = vsel %vm67, %v65, %v60
  %v69 = vsel %vm67, %v66, %v62
  %v70 = vld [vmem:[%s1] sm:$0xff]
  %v71 = vld [vmem:[%s1 + $0x8] sm:$0xf]
  %v72 = vld [vmem:[%s2] sm:$0x1]
  %v74 = vlaneseq
  %v75 = vshrl.u32 %v74, 7
  %v76 = vsub.s32 0, %v75
  %v77 = vrot.slane %v72, %v76
  %vm79 = vcmask 97280
  %v81 = vsel %vm79, %v68, 0
  %v84 = vsel %vm79, %v69, 0
  %vm86 = vcmask 1043456
  %v88 = vsel %vm86, %v71, 0
  %90 = vmatprep.subr.mxu0 0.0
  %91 = vmatpush1.msra.mxu0 0.0
  %92 = vmatprep.subr.mxu0 0.0
  %93 = vmatpush1.msra.mxu0 0.0
  %94 = vmatprep.subr.mxu0 0.0
  %95 = vmatpush1.msra.mxu0 0.0
  %96 = vmatprep.subr.mxu0 0.0
  %97 = vmatpush1.msra.mxu0 0.0
  %98 = vmatprep.subr.mxu0 0.0
  %99 = vmatpush1.msra.mxu0 0.0
  %100 = vmatprep.subr.mxu0 0.0
  %101 = vmatpush1.msra.mxu0 0.0
  %102 = vmatprep.subr.mxu0 0.0
  %103 = vmatpush1.msra.mxu0 0.0
  %104 = vmatprep.subr.mxu0 0.0
  %105 = vmatpush1.msra.mxu0 0.0
  %106 = vmatprep.subr.mxu0 0.0
  %107 = vmatpush1.msra.mxu0 0.0
  %108 = vmatprep.subr.mxu0 0.0
  %109 = vmatpush1.msra.mxu0 0.0
  %110 = vmatprep.subr.mxu0 0.0
  %111 = vmatpush1.msra.mxu0 0.0
  %112 = vmatprep.subr.mxu0 0.0
  %113 = vmatpush1.msra.mxu0 0.0
  %114 = vmatprep.subr.mxu0 0.0
  %115 = vmatpush1.msra.mxu0 0.0
  %116 = vmatprep.subr.mxu0 0.0
  %117 = vmatpush1.msra.mxu0 0.0
  %118 = vmatprep.subr.mxu0 0.0
  %119 = vmatpush1.msra.mxu0 %v88
  %120 = vmatprep.subr.mxu0 0.0
  %121 = vmatpush1.msra.mxu0 %v70
  %122 = vmatprep.subr.mxu0 0.0
  %123 = vmatpush2.msra.mxu0 0.0
  %124 = vmatprep.subr.mxu0 0.0
  %125 = vmatpush2.msra.mxu0 0.0
  %126 = vmatprep.subr.mxu0 0.0
  %127 = vmatpush2.msra.mxu0 0.0
  %128 = vmatprep.subr.mxu0 0.0
  %129 = vmatpush2.msra.mxu0 0.0
  %130 = vmatprep.subr.mxu0 0.0
  %131 = vmatpush2.msra.mxu0 0.0
  %132 = vmatprep.subr.mxu0 0.0
  %133 = vmatpush2.msra.mxu0 0.0
  %134 = vmatprep.subr.mxu0 0.0
  %135 = vmatpush2.msra.mxu0 0.0
  %136 = vmatprep.subr.mxu0 0.0
  %137 = vmatpush2.msra.mxu0 0.0
  %138 = vmatprep.subr.mxu0 0.0
  %139 = vmatpush2.msra.mxu0 0.0
  %140 = vmatprep.subr.mxu0 0.0
  %141 = vmatpush2.msra.mxu0 0.0
  %142 = vmatprep.subr.mxu0 0.0
  %143 = vmatpush2.msra.mxu0 0.0
  %144 = vmatprep.subr.mxu0 0.0
  %145 = vmatpush2.msra.mxu0 0.0
  %146 = vmatprep.subr.mxu0 0.0
  %147 = vmatpush2.msra.mxu0 0.0
  %148 = vmatprep.subr.mxu0 0.0
  %149 = vmatpush2.msra.mxu0 0.0
  %150 = vmatprep.subr.mxu0 0.0
  %151 = vmatpush2.msra.mxu0 0.0
  %152 = vmatprep.subr.mxu0 0.0
  %153 = vmatpush2.msra.mxu0 0.0
  %154 = vmatprep.mubr.f32.mxu0 0.0
  %155 = vmatmul.mubr.f32.gmra.mxu0 %v81
  %v156 = vpop.f32.mrf.mxu0
  %v157 = vadd.f32 %v77, %v156
  %v158 = vpop.f32.mrf.mxu0
  %159 = vmatprep.mubr.f32.mxu0 0.0
  %160 = vmatmul.mubr.f32.gmra.mxu0 %v84
  %v161 = vpop.f32.mrf.mxu0
  %v162 = vadd.f32 %v77, %v161
  %v163 = vpop.f32.mrf.mxu0
  %164 = vdwg.mxu0
  %v165 = vmax.f32 %v157, 0.0
  %v166 = vmax.f32 %v162, 0.0
  %167 = vst.msk [vmem:[#allocation3] sm:$0xff] %vm67, 0.0
  %vm168 = vcmask 58368
  %169 = vst.msk [vmem:[#allocation3 + $0x8] sm:$0x3] %vm168, 0.0
  %170 = vst.msk [vmem:[#allocation3 + $0x10] sm:$0xff] %vm67, 0.0
  %171 = vst.msk [vmem:[#allocation3 + $0x18] sm:$0x3] %vm168, 0.0
  %172 = vst.msk [vmem:[#allocation3 + $0x1] sm:$0xff] %vm67, %v165
  %173 = vst.msk [vmem:[#allocation3 + $0x11] sm:$0xff] %vm67, %v166
  %v174 = vld [vmem:[#allocation3] sm:$0xff]
  %v175 = vld [vmem:[#allocation3 + $0x10] sm:$0xff]
  %v176 = vld [vmem:[#allocation3 + $0x2] sm:$0xff]
  %v177 = vld [vmem:[#allocation3 + $0x12] sm:$0xff]
  %180 = vrot.lane.b32.xlu0 %v165, 8
  %v181 = vpop.permute.xlu0 %180
  %182 = vrot.lane.b32.xlu0 %v166, 8
  %v183 = vpop.permute.xlu0 %182
  %188 = vrot.lane.b32.xlu0 %v176, 16
  %v189 = vpop.permute.xlu0 %188
  %190 = vrot.lane.b32.xlu0 %v177, 16
  %v191 = vpop.permute.xlu0 %190
  %v194 = vsel %vm67, %v174, %v181
  %v195 = vsel %vm67, %v175, %v183
  %vm196 = vcmask 130048
  %v197 = vsel %vm196, %v194, %v189
  %v198 = vsel %vm196, %v195, %v191
  %v199 = vld [vmem:[%s3] sm:$0xff]
  %v200 = vld [vmem:[%s3 + $0x8] sm:$0xff]
  %v201 = vld [vmem:[%s3 + $0x10] sm:$0xff]
  %v202 = vld [vmem:[%s4] sm:$0x1]
  %v204 = vlaneseq
  %v205 = vshrl.u32 %v204, 7
  %v206 = vsub.s32 0, %v205
  %v207 = vrot.slane %v202, %v206
  %vm209 = vcmask 195584
  %v211 = vsel %vm209, %v197, 0
  %v214 = vsel %vm209, %v198, 0
  %216 = vmatprep.subr.mxu0 0.0
  %217 = vmatpush1.msra.mxu0 0.0
  %218 = vmatprep.subr.mxu0 0.0
  %219 = vmatpush1.msra.mxu0 0.0
  %220 = vmatprep.subr.mxu0 0.0
  %221 = vmatpush1.msra.mxu0 0.0
  %222 = vmatprep.subr.mxu0 0.0
  %223 = vmatpush1.msra.mxu0 0.0
  %224 = vmatprep.subr.mxu0 0.0
  %225 = vmatpush1.msra.mxu0 0.0
  %226 = vmatprep.subr.mxu0 0.0
  %227 = vmatpush1.msra.mxu0 0.0
  %228 = vmatprep.subr.mxu0 0.0
  %229 = vmatpush1.msra.mxu0 0.0
  %230 = vmatprep.subr.mxu0 0.0
  %231 = vmatpush1.msra.mxu0 0.0
  %232 = vmatprep.subr.mxu0 0.0
  %233 = vmatpush1.msra.mxu0 0.0
  %234 = vmatprep.subr.mxu0 0.0
  %235 = vmatpush1.msra.mxu0 0.0
  %236 = vmatprep.subr.mxu0 0.0
  %237 = vmatpush1.msra.mxu0 0.0
  %238 = vmatprep.subr.mxu0 0.0
  %239 = vmatpush1.msra.mxu0 0.0
  %240 = vmatprep.subr.mxu0 0.0
  %241 = vmatpush1.msra.mxu0 0.0
  %242 = vmatprep.subr.mxu0 0.0
  %243 = vmatpush1.msra.mxu0 %v201
  %244 = vmatprep.subr.mxu0 0.0
  %245 = vmatpush1.msra.mxu0 %v200
  %246 = vmatprep.subr.mxu0 0.0
  %247 = vmatpush1.msra.mxu0 %v199
  %248 = vmatprep.subr.mxu0 0.0
  %249 = vmatpush2.msra.mxu0 0.0
  %250 = vmatprep.subr.mxu0 0.0
  %251 = vmatpush2.msra.mxu0 0.0
  %252 = vmatprep.subr.mxu0 0.0
  %253 = vmatpush2.msra.mxu0 0.0
  %254 = vmatprep.subr.mxu0 0.0
  %255 = vmatpush2.msra.mxu0 0.0
  %256 = vmatprep.subr.mxu0 0.0
  %257 = vmatpush2.msra.mxu0 0.0
  %258 = vmatprep.subr.mxu0 0.0
  %259 = vmatpush2.msra.mxu0 0.0
  %260 = vmatprep.subr.mxu0 0.0
  %261 = vmatpush2.msra.mxu0 0.0
  %262 = vmatprep.subr.mxu0 0.0
  %263 = vmatpush2.msra.mxu0 0.0
  %264 = vmatprep.subr.mxu0 0.0
  %265 = vmatpush2.msra.mxu0 0.0
  %266 = vmatprep.subr.mxu0 0.0
  %267 = vmatpush2.msra.mxu0 0.0
  %268 = vmatprep.subr.mxu0 0.0
  %269 = vmatpush2.msra.mxu0 0.0
  %270 = vmatprep.subr.mxu0 0.0
  %271 = vmatpush2.msra.mxu0 0.0
  %272 = vmatprep.subr.mxu0 0.0
  %273 = vmatpush2.msra.mxu0 0.0
  %274 = vmatprep.subr.mxu0 0.0
  %275 = vmatpush2.msra.mxu0 0.0
  %276 = vmatprep.subr.mxu0 0.0
  %277 = vmatpush2.msra.mxu0 0.0
  %278 = vmatprep.subr.mxu0 0.0
  %279 = vmatpush2.msra.mxu0 0.0
  %280 = vmatprep.mubr.f32.mxu0 0.0
  %281 = vmatmul.mubr.f32.gmra.mxu0 %v211
  %v282 = vpop.f32.mrf.mxu0
  %v283 = vadd.f32 %v207, %v282
  %v284 = vpop.f32.mrf.mxu0
  %285 = vmatprep.mubr.f32.mxu0 0.0
  %286 = vmatmul.mubr.f32.gmra.mxu0 %v214
  %v287 = vpop.f32.mrf.mxu0
  %v288 = vadd.f32 %v207, %v287
  %v289 = vpop.f32.mrf.mxu0
  %290 = vdwg.mxu0
  %v291 = vmax.f32 %v283, 0.0
  %v292 = vmax.f32 %v288, 0.0
  %v293 = vld [vmem:[%s5] sm:$0xff]
  %v294 = vld [vmem:[%s5 + $0x8] sm:$0xff]
  %v295 = vld [vmem:[%s7] sm:$0x1]
  %v297 = vlaneseq
  %v298 = vshrl.u32 %v297, 7
  %v299 = vsub.s32 0, %v298
  %v300 = vrot.slane %v295, %v299
  %v303 = vsel %vm196, %v291, 0
  %v306 = vsel %vm196, %v292, 0
  %308 = vmatprep.subr.mxu0 0.0
  %309 = vmatpush1.msra.mxu0 0.0
  %310 = vmatprep.subr.mxu0 0.0
  %311 = vmatpush1.msra.mxu0 0.0
  %312 = vmatprep.subr.mxu0 0.0
  %313 = vmatpush1.msra.mxu0 0.0
  %314 = vmatprep.subr.mxu0 0.0
  %315 = vmatpush1.msra.mxu0 0.0
  %316 = vmatprep.subr.mxu0 0.0
  %317 = vmatpush1.msra.mxu0 0.0
  %318 = vmatprep.subr.mxu0 0.0
  %319 = vmatpush1.msra.mxu0 0.0
  %320 = vmatprep.subr.mxu0 0.0
  %321 = vmatpush1.msra.mxu0 0.0
  %322 = vmatprep.subr.mxu0 0.0
  %323 = vmatpush1.msra.mxu0 0.0
  %324 = vmatprep.subr.mxu0 0.0
  %325 = vmatpush1.msra.mxu0 0.0
  %326 = vmatprep.subr.mxu0 0.0
  %327 = vmatpush1.msra.mxu0 0.0
  %328 = vmatprep.subr.mxu0 0.0
  %329 = vmatpush1.msra.mxu0 0.0
  %330 = vmatprep.subr.mxu0 0.0
  %331 = vmatpush1.msra.mxu0 0.0
  %332 = vmatprep.subr.mxu0 0.0
  %333 = vmatpush1.msra.mxu0 0.0
  %334 = vmatprep.subr.mxu0 0.0
  %335 = vmatpush1.msra.mxu0 0.0
  %336 = vmatprep.subr.mxu0 0.0
  %337 = vmatpush1.msra.mxu0 %v294
  %338 = vmatprep.subr.mxu0 0.0
  %339 = vmatpush1.msra.mxu0 %v293
  %340 = vmatprep.subr.mxu0 0.0
  %341 = vmatpush2.msra.mxu0 0.0
  %342 = vmatprep.subr.mxu0 0.0
  %343 = vmatpush2.msra.mxu0 0.0
  %344 = vmatprep.subr.mxu0 0.0
  %345 = vmatpush2.msra.mxu0 0.0
  %346 = vmatprep.subr.mxu0 0.0
  %347 = vmatpush2.msra.mxu0 0.0
  %348 = vmatprep.subr.mxu0 0.0
  %349 = vmatpush2.msra.mxu0 0.0
  %350 = vmatprep.subr.mxu0 0.0
  %351 = vmatpush2.msra.mxu0 0.0
  %352 = vmatprep.subr.mxu0 0.0
  %353 = vmatpush2.msra.mxu0 0.0
  %354 = vmatprep.subr.mxu0 0.0
  %355 = vmatpush2.msra.mxu0 0.0
  %356 = vmatprep.subr.mxu0 0.0
  %357 = vmatpush2.msra.mxu0 0.0
  %358 = vmatprep.subr.mxu0 0.0
  %359 = vmatpush2.msra.mxu0 0.0
  %360 = vmatprep.subr.mxu0 0.0
  %361 = vmatpush2.msra.mxu0 0.0
  %362 = vmatprep.subr.mxu0 0.0
  %363 = vmatpush2.msra.mxu0 0.0
  %364 = vmatprep.subr.mxu0 0.0
  %365 = vmatpush2.msra.mxu0 0.0
  %366 = vmatprep.subr.mxu0 0.0
  %367 = vmatpush2.msra.mxu0 0.0
  %368 = vmatprep.subr.mxu0 0.0
  %369 = vmatpush2.msra.mxu0 0.0
  %370 = vmatprep.subr.mxu0 0.0
  %371 = vmatpush2.msra.mxu0 0.0
  %372 = vmatprep.mubr.f32.mxu0 0.0
  %373 = vmatmul.mubr.f32.gmra.mxu0 %v303
  %v374 = vpop.f32.mrf.mxu0
  %v375 = vadd.f32 %v300, %v374
  %v376 = vpop.f32.mrf.mxu0
  %377 = vmatprep.mubr.f32.mxu0 0.0
  %378 = vmatmul.mubr.f32.gmra.mxu0 %v306
  %v379 = vpop.f32.mrf.mxu0
  %v380 = vadd.f32 %v300, %v379
  %v381 = vpop.f32.mrf.mxu0
  %382 = vdwg.mxu0
  %383 = vst [vmem:[#allocation4] sm:$0xff] %v375
  %384 = vst [vmem:[#allocation4 + $0x8] sm:$0xff] %v380
  %v385 = vld [vmem:[%s6] sm:$0xff]
  %v386 = vld [vmem:[%s6 + $0x8] sm:$0xff]
  %v387 = vld [vmem:[%s6 + $0x10] sm:$0xff]
  %v388 = vld [vmem:[%s6 + $0x18] sm:$0xff]
  %v389 = vld [vmem:[#allocation4] sm:$0x1]
  %v390 = vld [vmem:[#allocation4 + $0x8] sm:$0x1]
  %vm391 = vcmask 261120
  %v393 = vsel %vm391, 0.0, 0
  %395 = vmatprep.subr.mxu0 0.0
  %396 = vmatpush1.msra.mxu0 0.0
  %397 = vmatprep.subr.mxu0 0.0
  %398 = vmatpush1.msra.mxu0 0.0
  %399 = vmatprep.subr.mxu0 0.0
  %400 = vmatpush1.msra.mxu0 0.0
  %401 = vmatprep.subr.mxu0 0.0
  %402 = vmatpush1.msra.mxu0 0.0
  %403 = vmatprep.subr.mxu0 0.0
  %404 = vmatpush1.msra.mxu0 0.0
  %405 = vmatprep.subr.mxu0 0.0
  %406 = vmatpush1.msra.mxu0 0.0
  %407 = vmatprep.subr.mxu0 0.0
  %408 = vmatpush1.msra.mxu0 0.0
  %409 = vmatprep.subr.mxu0 0.0
  %410 = vmatpush1.msra.mxu0 0.0
  %411 = vmatprep.subr.mxu0 0.0
  %412 = vmatpush1.msra.mxu0 0.0
  %413 = vmatprep.subr.mxu0 0.0
  %414 = vmatpush1.msra.mxu0 0.0
  %415 = vmatprep.subr.mxu0 0.0
  %416 = vmatpush1.msra.mxu0 0.0
  %417 = vmatprep.subr.mxu0 0.0
  %418 = vmatpush1.msra.mxu0 0.0
  %419 = vmatprep.subr.mxu0 0.0
  %420 = vmatpush1.msra.mxu0 %v388
  %421 = vmatprep.subr.mxu0 0.0
  %422 = vmatpush1.msra.mxu0 %v387
  %423 = vmatprep.subr.mxu0 0.0
  %424 = vmatpush1.msra.mxu0 %v386
  %425 = vmatprep.subr.mxu0 0.0
  %426 = vmatpush1.msra.mxu0 %v385
  %427 = vmatprep.subr.mxu0 0.0
  %428 = vmatpush2.msra.mxu0 0.0
  %429 = vmatprep.subr.mxu0 0.0
  %430 = vmatpush2.msra.mxu0 0.0
  %431 = vmatprep.subr.mxu0 0.0
  %432 = vmatpush2.msra.mxu0 0.0
  %433 = vmatprep.subr.mxu0 0.0
  %434 = vmatpush2.msra.mxu0 0.0
  %435 = vmatprep.subr.mxu0 0.0
  %436 = vmatpush2.msra.mxu0 0.0
  %437 = vmatprep.subr.mxu0 0.0
  %438 = vmatpush2.msra.mxu0 0.0
  %439 = vmatprep.subr.mxu0 0.0
  %440 = vmatpush2.msra.mxu0 0.0
  %441 = vmatprep.subr.mxu0 0.0
  %442 = vmatpush2.msra.mxu0 0.0
  %443 = vmatprep.subr.mxu0 0.0
  %444 = vmatpush2.msra.mxu0 0.0
  %445 = vmatprep.subr.mxu0 0.0
  %446 = vmatpush2.msra.mxu0 0.0
  %447 = vmatprep.subr.mxu0 0.0
  %448 = vmatpush2.msra.mxu0 0.0
  %449 = vmatprep.subr.mxu0 0.0
  %450 = vmatpush2.msra.mxu0 0.0
  %451 = vmatprep.subr.mxu0 0.0
  %452 = vmatpush2.msra.mxu0 0.0
  %453 = vmatprep.subr.mxu0 0.0
  %454 = vmatpush2.msra.mxu0 0.0
  %455 = vmatprep.subr.mxu0 0.0
  %456 = vmatpush2.msra.mxu0 0.0
  %457 = vmatprep.subr.mxu0 0.0
  %458 = vmatpush2.msra.mxu0 0.0
  %459 = vmatprep.mubr.f32.mxu0 0.0
  %460 = vmatmul.mubr.f32.gmra.mxu0 %v393
  %v461 = vpop.f32.mrf.mxu0
  %v462 = vadd.f32 0.0, %v461
  %v463 = vpop.f32.mrf.mxu0
  %464 = vdwg.mxu0
  %v466 = vrot.slane %v462, 1
  %v469 = vadd.f32 %v389, %v462
  %v470 = vadd.f32 %v390, %v466
  %v471 = vxor.u32 %v469, 2147483648
  %v472 = vxor.u32 %v470, 2147483648
  %v473 = vmul.f32 %v471, 1.442695
  %v474 = vpow.pop %v473
  %v475 = vmul.f32 %v472, 1.442695
  %v476 = vpow.pop %v475
  %v477 = vadd.f32 %v474, 1.0
  %v478 = vadd.f32 %v476, 1.0
  %v479 = vrcp.pop %v477
  %v480 = vmul.f32 1.0, %v479
  %v481 = vrcp.pop %v478
  %v482 = vmul.f32 1.0, %v481
  %v483 = vtanh.pop %v469
  %v484 = vtanh.pop %v470
  %v485 = vmul.f32 %v480, 0.0
  %v486 = vmul.f32 %v482, 0.0
  %489 = vrot.lane.b32.xlu0 %v483, 64
  %v490 = vpop.permute.xlu0 %489
  %491 = vrot.lane.b32.xlu0 %v484, 64
  %v492 = vpop.permute.xlu0 %491
  %v495 = vmul.f32 %v480, %v490
  %v496 = vmul.f32 %v482, %v492
  %499 = vrot.lane.b32.xlu0 %v495, 32
  %v500 = vpop.permute.xlu0 %499
  %501 = vrot.lane.b32.xlu0 %v496, 32
  %v502 = vpop.permute.xlu0 %501
  %v505 = vadd.f32 %v485, %v500
  %v506 = vadd.f32 %v486, %v502
  %v507 = vtanh.pop %v505
  %v508 = vtanh.pop %v506
  %511 = vrot.lane.b32.xlu0 %v507, 64
  %v512 = vpop.permute.xlu0 %511
  %513 = vrot.lane.b32.xlu0 %v508, 64
  %v514 = vpop.permute.xlu0 %513
  %v517 = vmul.f32 %v480, %v512
  %v518 = vmul.f32 %v482, %v514
  %521 = vrot.lane.b32.xlu0 %v517, 32
  %v522 = vpop.permute.xlu0 %521
  %523 = vrot.lane.b32.xlu0 %v518, 32
  %v524 = vpop.permute.xlu0 %523
  %vm527 = vcmask 253952
  %528 = vst.msk [vmem:[#allocation5] sm:$0x1] %vm527, %v522
  %529 = vst.msk [vmem:[#allocation5 + $0x8] sm:$0x1] %vm527, %v524
  %v530 = vld [vmem:[#allocation4 + $0x1] sm:$0x1]
  %v531 = vld [vmem:[#allocation4 + $0x9] sm:$0x1]
  %v532 = vrot.slane %v518, 7
  %vm533 = vcmask 1041409
  %v534 = vsel %vm533, %v532, %v517
  %535 = vrot.lane.b32.xlu0 %v534, 32
  %v536 = vpop.permute.xlu0 %535
  %v537 = vsel %vm391, %v536, 0
  %539 = vmatprep.subr.mxu0 0.0
  %540 = vmatpush1.msra.mxu0 0.0
  %541 = vmatprep.subr.mxu0 0.0
  %542 = vmatpush1.msra.mxu0 0.0
  %543 = vmatprep.subr.mxu0 0.0
  %544 = vmatpush1.msra.mxu0 0.0
  %545 = vmatprep.subr.mxu0 0.0
  %546 = vmatpush1.msra.mxu0 0.0
  %547 = vmatprep.subr.mxu0 0.0
  %548 = vmatpush1.msra.mxu0 0.0
  %549 = vmatprep.subr.mxu0 0.0
  %550 = vmatpush1.msra.mxu0 0.0
  %551 = vmatprep.subr.mxu0 0.0
  %552 = vmatpush1.msra.mxu0 0.0
  %553 = vmatprep.subr.mxu0 0.0
  %554 = vmatpush1.msra.mxu0 0.0
  %555 = vmatprep.subr.mxu0 0.0
  %556 = vmatpush1.msra.mxu0 0.0
  %557 = vmatprep.subr.mxu0 0.0
  %558 = vmatpush1.msra.mxu0 0.0
  %559 = vmatprep.subr.mxu0 0.0
  %560 = vmatpush1.msra.mxu0 0.0
  %561 = vmatprep.subr.mxu0 0.0
  %562 = vmatpush1.msra.mxu0 0.0
  %563 = vmatprep.subr.mxu0 0.0
  %564 = vmatpush1.msra.mxu0 %v388
  %565 = vmatprep.subr.mxu0 0.0
  %566 = vmatpush1.msra.mxu0 %v387
  %567 = vmatprep.subr.mxu0 0.0
  %568 = vmatpush1.msra.mxu0 %v386
  %569 = vmatprep.subr.mxu0 0.0
  %570 = vmatpush1.msra.mxu0 %v385
  %571 = vmatprep.subr.mxu0 0.0
  %572 = vmatpush2.msra.mxu0 0.0
  %573 = vmatprep.subr.mxu0 0.0
  %574 = vmatpush2.msra.mxu0 0.0
  %575 = vmatprep.subr.mxu0 0.0
  %576 = vmatpush2.msra.mxu0 0.0
  %577 = vmatprep.subr.mxu0 0.0
  %578 = vmatpush2.msra.mxu0 0.0
  %579 = vmatprep.subr.mxu0 0.0
  %580 = vmatpush2.msra.mxu0 0.0
  %581 = vmatprep.subr.mxu0 0.0
  %582 = vmatpush2.msra.mxu0 0.0
  %583 = vmatprep.subr.mxu0 0.0
  %584 = vmatpush2.msra.mxu0 0.0
  %585 = vmatprep.subr.mxu0 0.0
  %586 = vmatpush2.msra.mxu0 0.0
  %587 = vmatprep.subr.mxu0 0.0
  %588 = vmatpush2.msra.mxu0 0.0
  %589 = vmatprep.subr.mxu0 0.0
  %590 = vmatpush2.msra.mxu0 0.0
  %591 = vmatprep.subr.mxu0 0.0
  %592 = vmatpush2.msra.mxu0 0.0
  %593 = vmatprep.subr.mxu0 0.0
  %594 = vmatpush2.msra.mxu0 0.0
  %595 = vmatprep.subr.mxu0 0.0
  %596 = vmatpush2.msra.mxu0 0.0
  %597 = vmatprep.subr.mxu0 0.0
  %598 = vmatpush2.msra.mxu0 0.0
  %599 = vmatprep.subr.mxu0 0.0
  %600 = vmatpush2.msra.mxu0 0.0
  %601 = vmatprep.subr.mxu0 0.0
  %602 = vmatpush2.msra.mxu0 0.0
  %603 = vmatprep.mubr.f32.mxu0 0.0
  %604 = vmatmul.mubr.f32.gmra.mxu0 %v537
  %v605 = vpop.f32.mrf.mxu0
  %v606 = vadd.f32 0.0, %v605
  %v607 = vpop.f32.mrf.mxu0
  %608 = vdwg.mxu0
  %v610 = vrot.slane %v606, 1
  %v613 = vadd.f32 %v530, %v606
  %v614 = vadd.f32 %v531, %v610
  %v615 = vxor.u32 %v613, 2147483648
  %v616 = vxor.u32 %v614, 2147483648
  %v617 = vmul.f32 %v615, 1.442695
  %v618 = vpow.pop %v617
  %v619 = vmul.f32 %v616, 1.442695
  %v620 = vpow.pop %v619
  %v621 = vadd.f32 %v618, 1.0
  %v622 = vadd.f32 %v620, 1.0
  %v623 = vrcp.pop %v621
  %v624 = vmul.f32 1.0, %v623
  %v625 = vrcp.pop %v622
  %v626 = vmul.f32 1.0, %v625
  %v627 = vtanh.pop %v613
  %v628 = vtanh.pop %v614
  %v629 = vmul.f32 %v624, %v505
  %v630 = vmul.f32 %v626, %v506
  %633 = vrot.lane.b32.xlu0 %v627, 64
  %v634 = vpop.permute.xlu0 %633
  %635 = vrot.lane.b32.xlu0 %v628, 64
  %v636 = vpop.permute.xlu0 %635
  %v639 = vmul.f32 %v624, %v634
  %v640 = vmul.f32 %v626, %v636
  %643 = vrot.lane.b32.xlu0 %v639, 32
  %v644 = vpop.permute.xlu0 %643
  %645 = vrot.lane.b32.xlu0 %v640, 32
  %v646 = vpop.permute.xlu0 %645
  %v649 = vadd.f32 %v629, %v644
  %v650 = vadd.f32 %v630, %v646
  %v651 = vtanh.pop %v649
  %v652 = vtanh.pop %v650
  %655 = vrot.lane.b32.xlu0 %v651, 64
  %v656 = vpop.permute.xlu0 %655
  %657 = vrot.lane.b32.xlu0 %v652, 64
  %v658 = vpop.permute.xlu0 %657
  %v661 = vmul.f32 %v624, %v656
  %v662 = vmul.f32 %v626, %v658
  %665 = vrot.lane.b32.xlu0 %v661, 32
  %v666 = vpop.permute.xlu0 %665
  %667 = vrot.lane.b32.xlu0 %v662, 32
  %v668 = vpop.permute.xlu0 %667
  %671 = vst.msk [vmem:[#allocation5 + $0x1] sm:$0x1] %vm527, %v666
  %672 = vst.msk [vmem:[#allocation5 + $0x9] sm:$0x1] %vm527, %v668
  %v673 = vld [vmem:[#allocation4 + $0x2] sm:$0x1]
  %v674 = vld [vmem:[#allocation4 + $0xa] sm:$0x1]
  %v675 = vrot.slane %v662, 7
  %v676 = vsel %vm533, %v675, %v661
  %677 = vrot.lane.b32.xlu0 %v676, 32
  %v678 = vpop.permute.xlu0 %677
  %v679 = vsel %vm391, %v678, 0
  %681 = vmatprep.subr.mxu0 0.0
  %682 = vmatpush1.msra.mxu0 0.0
  %683 = vmatprep.subr.mxu0 0.0
  %684 = vmatpush1.msra.mxu0 0.0
  %685 = vmatprep.subr.mxu0 0.0
  %686 = vmatpush1.msra.mxu0 0.0
  %687 = vmatprep.subr.mxu0 0.0
  %688 = vmatpush1.msra.mxu0 0.0
  %689 = vmatprep.subr.mxu0 0.0
  %690 = vmatpush1.msra.mxu0 0.0
  %691 = vmatprep.subr.mxu0 0.0
  %692 = vmatpush1.msra.mxu0 0.0
  %693 = vmatprep.subr.mxu0 0.0
  %694 = vmatpush1.msra.mxu0 0.0
  %695 = vmatprep.subr.mxu0 0.0
  %696 = vmatpush1.msra.mxu0 0.0
  %697 = vmatprep.subr.mxu0 0.0
  %698 = vmatpush1.msra.mxu0 0.0
  %699 = vmatprep.subr.mxu0 0.0
  %700 = vmatpush1.msra.mxu0 0.0
  %701 = vmatprep.subr.mxu0 0.0
  %702 = vmatpush1.msra.mxu0 0.0
  %703 = vmatprep.subr.mxu0 0.0
  %704 = vmatpush1.msra.mxu0 0.0
  %705 = vmatprep.subr.mxu0 0.0
  %706 = vmatpush1.msra.mxu0 %v388
  %707 = vmatprep.subr.mxu0 0.0
  %708 = vmatpush1.msra.mxu0 %v387
  %709 = vmatprep.subr.mxu0 0.0
  %710 = vmatpush1.msra.mxu0 %v386
  %711 = vmatprep.subr.mxu0 0.0
  %712 = vmatpush1.msra.mxu0 %v385
  %713 = vmatprep.subr.mxu0 0.0
  %714 = vmatpush2.msra.mxu0 0.0
  %715 = vmatprep.subr.mxu0 0.0
  %716 = vmatpush2.msra.mxu0 0.0
  %717 = vmatprep.subr.mxu0 0.0
  %718 = vmatpush2.msra.mxu0 0.0
  %719 = vmatprep.subr.mxu0 0.0
  %720 = vmatpush2.msra.mxu0 0.0
  %721 = vmatprep.subr.mxu0 0.0
  %722 = vmatpush2.msra.mxu0 0.0
  %723 = vmatprep.subr.mxu0 0.0
  %724 = vmatpush2.msra.mxu0 0.0
  %725 = vmatprep.subr.mxu0 0.0
  %726 = vmatpush2.msra.mxu0 0.0
  %727 = vmatprep.subr.mxu0 0.0
  %728 = vmatpush2.msra.mxu0 0.0
  %729 = vmatprep.subr.mxu0 0.0
  %730 = vmatpush2.msra.mxu0 0.0
  %731 = vmatprep.subr.mxu0 0.0
  %732 = vmatpush2.msra.mxu0 0.0
  %733 = vmatprep.subr.mxu0 0.0
  %734 = vmatpush2.msra.mxu0 0.0
  %735 = vmatprep.subr.mxu0 0.0
  %736 = vmatpush2.msra.mxu0 0.0
  %737 = vmatprep.subr.mxu0 0.0
  %738 = vmatpush2.msra.mxu0 0.0
  %739 = vmatprep.subr.mxu0 0.0
  %740 = vmatpush2.msra.mxu0 0.0
  %741 = vmatprep.subr.mxu0 0.0
  %742 = vmatpush2.msra.mxu0 0.0
  %743 = vmatprep.subr.mxu0 0.0
  %744 = vmatpush2.msra.mxu0 0.0
  %745 = vmatprep.mubr.f32.mxu0 0.0
  %746 = vmatmul.mubr.f32.gmra.mxu0 %v679
  %v747 = vpop.f32.mrf.mxu0
  %v748 = vadd.f32 0.0, %v747
  %v749 = vpop.f32.mrf.mxu0
  %750 = vdwg.mxu0
  %v752 = vrot.slane %v748, 1
  %v755 = vadd.f32 %v673, %v748
  %v756 = vadd.f32 %v674, %v752
  %v757 = vxor.u32 %v755, 2147483648
  %v758 = vxor.u32 %v756, 2147483648
  %v759 = vmul.f32 %v757, 1.442695
  %v760 = vpow.pop %v759
  %v761 = vmul.f32 %v758, 1.442695
  %v762 = vpow.pop %v761
  %v763 = vadd.f32 %v760, 1.0
  %v764 = vadd.f32 %v762, 1.0
  %v765 = vrcp.pop %v763
  %v766 = vmul.f32 1.0, %v765
  %v767 = vrcp.pop %v764
  %v768 = vmul.f32 1.0, %v767
  %v769 = vtanh.pop %v755
  %v770 = vtanh.pop %v756
  %v771 = vmul.f32 %v766, %v649
  %v772 = vmul.f32 %v768, %v650
  %775 = vrot.lane.b32.xlu0 %v769, 64
  %v776 = vpop.permute.xlu0 %775
  %777 = vrot.lane.b32.xlu0 %v770, 64
  %v778 = vpop.permute.xlu0 %777
  %v781 = vmul.f32 %v766, %v776
  %v782 = vmul.f32 %v768, %v778
  %785 = vrot.lane.b32.xlu0 %v781, 32
  %v786 = vpop.permute.xlu0 %785
  %787 = vrot.lane.b32.xlu0 %v782, 32
  %v788 = vpop.permute.xlu0 %787
  %v791 = vadd.f32 %v771, %v786
  %v792 = vadd.f32 %v772, %v788
  %v793 = vtanh.pop %v791
  %v794 = vtanh.pop %v792
  %797 = vrot.lane.b32.xlu0 %v793, 64
  %v798 = vpop.permute.xlu0 %797
  %799 = vrot.lane.b32.xlu0 %v794, 64
  %v800 = vpop.permute.xlu0 %799
  %v803 = vmul.f32 %v766, %v798
  %v804 = vmul.f32 %v768, %v800
  %807 = vrot.lane.b32.xlu0 %v803, 32
  %v808 = vpop.permute.xlu0 %807
  %809 = vrot.lane.b32.xlu0 %v804, 32
  %v810 = vpop.permute.xlu0 %809
  %813 = vst.msk [vmem:[#allocation5 + $0x2] sm:$0x1] %vm527, %v808
  %814 = vst.msk [vmem:[#allocation5 + $0xa] sm:$0x1] %vm527, %v810
  %v815 = vld [vmem:[#allocation4 + $0x3] sm:$0x1]
  %v816 = vld [vmem:[#allocation4 + $0xb] sm:$0x1]
  %v817 = vrot.slane %v804, 7
  %v818 = vsel %vm533, %v817, %v803
  %819 = vrot.lane.b32.xlu0 %v818, 32
  %v820 = vpop.permute.xlu0 %819
  %v821 = vsel %vm391, %v820, 0
  %823 = vmatprep.subr.mxu0 0.0
  %824 = vmatpush1.msra.mxu0 0.0
  %825 = vmatprep.subr.mxu0 0.0
  %826 = vmatpush1.msra.mxu0 0.0
  %827 = vmatprep.subr.mxu0 0.0
  %828 = vmatpush1.msra.mxu0 0.0
  %829 = vmatprep.subr.mxu0 0.0
  %830 = vmatpush1.msra.mxu0 0.0
  %831 = vmatprep.subr.mxu0 0.0
  %832 = vmatpush1.msra.mxu0 0.0
  %833 = vmatprep.subr.mxu0 0.0
  %834 = vmatpush1.msra.mxu0 0.0
  %835 = vmatprep.subr.mxu0 0.0
  %836 = vmatpush1.msra.mxu0 0.0
  %837 = vmatprep.subr.mxu0 0.0
  %838 = vmatpush1.msra.mxu0 0.0
  %839 = vmatprep.subr.mxu0 0.0
  %840 = vmatpush1.msra.mxu0 0.0
  %841 = vmatprep.subr.mxu0 0.0
  %842 = vmatpush1.msra.mxu0 0.0
  %843 = vmatprep.subr.mxu0 0.0
  %844 = vmatpush1.msra.mxu0 0.0
  %845 = vmatprep.subr.mxu0 0.0
  %846 = vmatpush1.msra.mxu0 0.0
  %847 = vmatprep.subr.mxu0 0.0
  %848 = vmatpush1.msra.mxu0 %v388
  %849 = vmatprep.subr.mxu0 0.0
  %850 = vmatpush1.msra.mxu0 %v387
  %851 = vmatprep.subr.mxu0 0.0
  %852 = vmatpush1.msra.mxu0 %v386
  %853 = vmatprep.subr.mxu0 0.0
  %854 = vmatpush1.msra.mxu0 %v385
  %855 = vmatprep.subr.mxu0 0.0
  %856 = vmatpush2.msra.mxu0 0.0
  %857 = vmatprep.subr.mxu0 0.0
  %858 = vmatpush2.msra.mxu0 0.0
  %859 = vmatprep.subr.mxu0 0.0
  %860 = vmatpush2.msra.mxu0 0.0
  %861 = vmatprep.subr.mxu0 0.0
  %862 = vmatpush2.msra.mxu0 0.0
  %863 = vmatprep.subr.mxu0 0.0
  %864 = vmatpush2.msra.mxu0 0.0
  %865 = vmatprep.subr.mxu0 0.0
  %866 = vmatpush2.msra.mxu0 0.0
  %867 = vmatprep.subr.mxu0 0.0
  %868 = vmatpush2.msra.mxu0 0.0
  %869 = vmatprep.subr.mxu0 0.0
  %870 = vmatpush2.msra.mxu0 0.0
  %871 = vmatprep.subr.mxu0 0.0
  %872 = vmatpush2.msra.mxu0 0.0
  %873 = vmatprep.subr.mxu0 0.0
  %874 = vmatpush2.msra.mxu0 0.0
  %875 = vmatprep.subr.mxu0 0.0
  %876 = vmatpush2.msra.mxu0 0.0
  %877 = vmatprep.subr.mxu0 0.0
  %878 = vmatpush2.msra.mxu0 0.0
  %879 = vmatprep.subr.mxu0 0.0
  %880 = vmatpush2.msra.mxu0 0.0
  %881 = vmatprep.subr.mxu0 0.0
  %882 = vmatpush2.msra.mxu0 0.0
  %883 = vmatprep.subr.mxu0 0.0
  %884 = vmatpush2.msra.mxu0 0.0
  %885 = vmatprep.subr.mxu0 0.0
  %886 = vmatpush2.msra.mxu0 0.0
  %887 = vmatprep.mubr.f32.mxu0 0.0
  %888 = vmatmul.mubr.f32.gmra.mxu0 %v821
  %v889 = vpop.f32.mrf.mxu0
  %v890 = vadd.f32 0.0, %v889
  %v891 = vpop.f32.mrf.mxu0
  %892 = vdwg.mxu0
  %v894 = vrot.slane %v890, 1
  %v897 = vadd.f32 %v815, %v890
  %v898 = vadd.f32 %v816, %v894
  %v899 = vxor.u32 %v897, 2147483648
  %v900 = vxor.u32 %v898, 2147483648
  %v901 = vmul.f32 %v899, 1.442695
  %v902 = vpow.pop %v901
  %v903 = vmul.f32 %v900, 1.442695
  %v904 = vpow.pop %v903
  %v905 = vadd.f32 %v902, 1.0
  %v906 = vadd.f32 %v904, 1.0
  %v907 = vrcp.pop %v905
  %v908 = vmul.f32 1.0, %v907
  %v909 = vrcp.pop %v906
  %v910 = vmul.f32 1.0, %v909
  %v911 = vtanh.pop %v897
  %v912 = vtanh.pop %v898
  %v913 = vmul.f32 %v908, %v791
  %v914 = vmul.f32 %v910, %v792
  %917 = vrot.lane.b32.xlu0 %v911, 64
  %v918 = vpop.permute.xlu0 %917
  %919 = vrot.lane.b32.xlu0 %v912, 64
  %v920 = vpop.permute.xlu0 %919
  %v923 = vmul.f32 %v908, %v918
  %v924 = vmul.f32 %v910, %v920
  %927 = vrot.lane.b32.xlu0 %v923, 32
  %v928 = vpop.permute.xlu0 %927
  %929 = vrot.lane.b32.xlu0 %v924, 32
  %v930 = vpop.permute.xlu0 %929
  %v933 = vadd.f32 %v913, %v928
  %v934 = vadd.f32 %v914, %v930
  %v935 = vtanh.pop %v933
  %v936 = vtanh.pop %v934
  %939 = vrot.lane.b32.xlu0 %v935, 64
  %v940 = vpop.permute.xlu0 %939
  %941 = vrot.lane.b32.xlu0 %v936, 64
  %v942 = vpop.permute.xlu0 %941
  %v945 = vmul.f32 %v908, %v940
  %v946 = vmul.f32 %v910, %v942
  %949 = vrot.lane.b32.xlu0 %v945, 32
  %v950 = vpop.permute.xlu0 %949
  %951 = vrot.lane.b32.xlu0 %v946, 32
  %v952 = vpop.permute.xlu0 %951
  %955 = vst.msk [vmem:[#allocation5 + $0x3] sm:$0x1] %vm527, %v950
  %956 = vst.msk [vmem:[#allocation5 + $0xb] sm:$0x1] %vm527, %v952
  %v957 = vld [vmem:[#allocation4 + $0x4] sm:$0x1]
  %v958 = vld [vmem:[#allocation4 + $0xc] sm:$0x1]
  %v959 = vrot.slane %v946, 7
  %v960 = vsel %vm533, %v959, %v945
  %961 = vrot.lane.b32.xlu0 %v960, 32
  %v962 = vpop.permute.xlu0 %961
  %v963 = vsel %vm391, %v962, 0
  %965 = vmatprep.subr.mxu0 0.0
  %966 = vmatpush1.msra.mxu0 0.0
  %967 = vmatprep.subr.mxu0 0.0
  %968 = vmatpush1.msra.mxu0 0.0
  %969 = vmatprep.subr.mxu0 0.0
  %970 = vmatpush1.msra.mxu0 0.0
  %971 = vmatprep.subr.mxu0 0.0
  %972 = vmatpush1.msra.mxu0 0.0
  %973 = vmatprep.subr.mxu0 0.0
  %974 = vmatpush1.msra.mxu0 0.0
  %975 = vmatprep.subr.mxu0 0.0
  %976 = vmatpush1.msra.mxu0 0.0
  %977 = vmatprep.subr.mxu0 0.0
  %978 = vmatpush1.msra.mxu0 0.0
  %979 = vmatprep.subr.mxu0 0.0
  %980 = vmatpush1.msra.mxu0 0.0
  %981 = vmatprep.subr.mxu0 0.0
  %982 = vmatpush1.msra.mxu0 0.0
  %983 = vmatprep.subr.mxu0 0.0
  %984 = vmatpush1.msra.mxu0 0.0
  %985 = vmatprep.subr.mxu0 0.0
  %986 = vmatpush1.msra.mxu0 0.0
  %987 = vmatprep.subr.mxu0 0.0
  %988 = vmatpush1.msra.mxu0 0.0
  %989 = vmatprep.subr.mxu0 0.0
  %990 = vmatpush1.msra.mxu0 %v388
  %991 = vmatprep.subr.mxu0 0.0
  %992 = vmatpush1.msra.mxu0 %v387
  %993 = vmatprep.subr.mxu0 0.0
  %994 = vmatpush1.msra.mxu0 %v386
  %995 = vmatprep.subr.mxu0 0.0
  %996 = vmatpush1.msra.mxu0 %v385
  %997 = vmatprep.subr.mxu0 0.0
  %998 = vmatpush2.msra.mxu0 0.0
  %999 = vmatprep.subr.mxu0 0.0
  %1000 = vmatpush2.msra.mxu0 0.0
  %1001 = vmatprep.subr.mxu0 0.0
  %1002 = vmatpush2.msra.mxu0 0.0
  %1003 = vmatprep.subr.mxu0 0.0
  %1004 = vmatpush2.msra.mxu0 0.0
  %1005 = vmatprep.subr.mxu0 0.0
  %1006 = vmatpush2.msra.mxu0 0.0
  %1007 = vmatprep.subr.mxu0 0.0
  %1008 = vmatpush2.msra.mxu0 0.0
  %1009 = vmatprep.subr.mxu0 0.0
  %1010 = vmatpush2.msra.mxu0 0.0
  %1011 = vmatprep.subr.mxu0 0.0
  %1012 = vmatpush2.msra.mxu0 0.0
  %1013 = vmatprep.subr.mxu0 0.0
  %1014 = vmatpush2.msra.mxu0 0.0
  %1015 = vmatprep.subr.mxu0 0.0
  %1016 = vmatpush2.msra.mxu0 0.0
  %1017 = vmatprep.subr.mxu0 0.0
  %1018 = vmatpush2.msra.mxu0 0.0
  %1019 = vmatprep.subr.mxu0 0.0
  %1020 = vmatpush2.msra.mxu0 0.0
  %1021 = vmatprep.subr.mxu0 0.0
  %1022 = vmatpush2.msra.mxu0 0.0
  %1023 = vmatprep.subr.mxu0 0.0
  %1024 = vmatpush2.msra.mxu0 0.0
  %1025 = vmatprep.subr.mxu0 0.0
  %1026 = vmatpush2.msra.mxu0 0.0
  %1027 = vmatprep.subr.mxu0 0.0
  %1028 = vmatpush2.msra.mxu0 0.0
  %1029 = vmatprep.mubr.f32.mxu0 0.0
  %1030 = vmatmul.mubr.f32.gmra.mxu0 %v963
  %v1031 = vpop.f32.mrf.mxu0
  %v1032 = vadd.f32 0.0, %v1031
  %v1033 = vpop.f32.mrf.mxu0
  %1034 = vdwg.mxu0
  %v1036 = vrot.slane %v1032, 1
  %v1039 = vadd.f32 %v957, %v1032
  %v1040 = vadd.f32 %v958, %v1036
  %v1041 = vxor.u32 %v1039, 2147483648
  %v1042 = vxor.u32 %v1040, 2147483648
  %v1043 = vmul.f32 %v1041, 1.442695
  %v1044 = vpow.pop %v1043
  %v1045 = vmul.f32 %v1042, 1.442695
  %v1046 = vpow.pop %v1045
  %v1047 = vadd.f32 %v1044, 1.0
  %v1048 = vadd.f32 %v1046, 1.0
  %v1049 = vrcp.pop %v1047
  %v1050 = vmul.f32 1.0, %v1049
  %v1051 = vrcp.pop %v1048
  %v1052 = vmul.f32 1.0, %v1051
  %v1053 = vtanh.pop %v1039
  %v1054 = vtanh.pop %v1040
  %v1055 = vmul.f32 %v1050, %v933
  %v1056 = vmul.f32 %v1052, %v934
  %1059 = vrot.lane.b32.xlu0 %v1053, 64
  %v1060 = vpop.permute.xlu0 %1059
  %1061 = vrot.lane.b32.xlu0 %v1054, 64
  %v1062 = vpop.permute.xlu0 %1061
  %v1065 = vmul.f32 %v1050, %v1060
  %v1066 = vmul.f32 %v1052, %v1062
  %1069 = vrot.lane.b32.xlu0 %v1065, 32
  %v1070 = vpop.permute.xlu0 %1069
  %1071 = vrot.lane.b32.xlu0 %v1066, 32
  %v1072 = vpop.permute.xlu0 %1071
  %v1075 = vadd.f32 %v1055, %v1070
  %v1076 = vadd.f32 %v1056, %v1072
  %v1077 = vtanh.pop %v1075
  %v1078 = vtanh.pop %v1076
  %1081 = vrot.lane.b32.xlu0 %v1077, 64
  %v1082 = vpop.permute.xlu0 %1081
  %1083 = vrot.lane.b32.xlu0 %v1078, 64
  %v1084 = vpop.permute.xlu0 %1083
  %v1087 = vmul.f32 %v1050, %v1082
  %v1088 = vmul.f32 %v1052, %v1084
  %1091 = vrot.lane.b32.xlu0 %v1087, 32
  %v1092 = vpop.permute.xlu0 %1091
  %1093 = vrot.lane.b32.xlu0 %v1088, 32
  %v1094 = vpop.permute.xlu0 %1093
  %1097 = vst.msk [vmem:[#allocation5 + $0x4] sm:$0x1] %vm527, %v1092
  %1098 = vst.msk [vmem:[#allocation5 + $0xc] sm:$0x1] %vm527, %v1094
  %v1099 = vld [vmem:[#allocation4 + $0x5] sm:$0x1]
  %v1100 = vld [vmem:[#allocation4 + $0xd] sm:$0x1]
  %v1101 = vrot.slane %v1088, 7
  %v1102 = vsel %vm533, %v1101, %v1087
  %1103 = vrot.lane.b32.xlu0 %v1102, 32
  %v1104 = vpop.permute.xlu0 %1103
  %v1105 = vsel %vm391, %v1104, 0
  %1107 = vmatprep.subr.mxu0 0.0
  %1108 = vmatpush1.msra.mxu0 0.0
  %1109 = vmatprep.subr.mxu0 0.0
  %1110 = vmatpush1.msra.mxu0 0.0
  %1111 = vmatprep.subr.mxu0 0.0
  %1112 = vmatpush1.msra.mxu0 0.0
  %1113 = vmatprep.subr.mxu0 0.0
  %1114 = vmatpush1.msra.mxu0 0.0
  %1115 = vmatprep.subr.mxu0 0.0
  %1116 = vmatpush1.msra.mxu0 0.0
  %1117 = vmatprep.subr.mxu0 0.0
  %1118 = vmatpush1.msra.mxu0 0.0
  %1119 = vmatprep.subr.mxu0 0.0
  %1120 = vmatpush1.msra.mxu0 0.0
  %1121 = vmatprep.subr.mxu0 0.0
  %1122 = vmatpush1.msra.mxu0 0.0
  %1123 = vmatprep.subr.mxu0 0.0
  %1124 = vmatpush1.msra.mxu0 0.0
  %1125 = vmatprep.subr.mxu0 0.0
  %1126 = vmatpush1.msra.mxu0 0.0
  %1127 = vmatprep.subr.mxu0 0.0
  %1128 = vmatpush1.msra.mxu0 0.0
  %1129 = vmatprep.subr.mxu0 0.0
  %1130 = vmatpush1.msra.mxu0 0.0
  %1131 = vmatprep.subr.mxu0 0.0
  %1132 = vmatpush1.msra.mxu0 %v388
  %1133 = vmatprep.subr.mxu0 0.0
  %1134 = vmatpush1.msra.mxu0 %v387
  %1135 = vmatprep.subr.mxu0 0.0
  %1136 = vmatpush1.msra.mxu0 %v386
  %1137 = vmatprep.subr.mxu0 0.0
  %1138 = vmatpush1.msra.mxu0 %v385
  %1139 = vmatprep.subr.mxu0 0.0
  %1140 = vmatpush2.msra.mxu0 0.0
  %1141 = vmatprep.subr.mxu0 0.0
  %1142 = vmatpush2.msra.mxu0 0.0
  %1143 = vmatprep.subr.mxu0 0.0
  %1144 = vmatpush2.msra.mxu0 0.0
  %1145 = vmatprep.subr.mxu0 0.0
  %1146 = vmatpush2.msra.mxu0 0.0
  %1147 = vmatprep.subr.mxu0 0.0
  %1148 = vmatpush2.msra.mxu0 0.0
  %1149 = vmatprep.subr.mxu0 0.0
  %1150 = vmatpush2.msra.mxu0 0.0
  %1151 = vmatprep.subr.mxu0 0.0
  %1152 = vmatpush2.msra.mxu0 0.0
  %1153 = vmatprep.subr.mxu0 0.0
  %1154 = vmatpush2.msra.mxu0 0.0
  %1155 = vmatprep.subr.mxu0 0.0
  %1156 = vmatpush2.msra.mxu0 0.0
  %1157 = vmatprep.subr.mxu0 0.0
  %1158 = vmatpush2.msra.mxu0 0.0
  %1159 = vmatprep.subr.mxu0 0.0
  %1160 = vmatpush2.msra.mxu0 0.0
  %1161 = vmatprep.subr.mxu0 0.0
  %1162 = vmatpush2.msra.mxu0 0.0
  %1163 = vmatprep.subr.mxu0 0.0
  %1164 = vmatpush2.msra.mxu0 0.0
  %1165 = vmatprep.subr.mxu0 0.0
  %1166 = vmatpush2.msra.mxu0 0.0
  %1167 = vmatprep.subr.mxu0 0.0
  %1168 = vmatpush2.msra.mxu0 0.0
  %1169 = vmatprep.subr.mxu0 0.0
  %1170 = vmatpush2.msra.mxu0 0.0
  %1171 = vmatprep.mubr.f32.mxu0 0.0
  %1172 = vmatmul.mubr.f32.gmra.mxu0 %v1105
  %v1173 = vpop.f32.mrf.mxu0
  %v1174 = vadd.f32 0.0, %v1173
  %v1175 = vpop.f32.mrf.mxu0
  %1176 = vdwg.mxu0
  %v1178 = vrot.slane %v1174, 1
  %v1181 = vadd.f32 %v1099, %v1174
  %v1182 = vadd.f32 %v1100, %v1178
  %v1183 = vxor.u32 %v1181, 2147483648
  %v1184 = vxor.u32 %v1182, 2147483648
  %v1185 = vmul.f32 %v1183, 1.442695
  %v1186 = vpow.pop %v1185
  %v1187 = vmul.f32 %v1184, 1.442695
  %v1188 = vpow.pop %v1187
  %v1189 = vadd.f32 %v1186, 1.0
  %v1190 = vadd.f32 %v1188, 1.0
  %v1191 = vrcp.pop %v1189
  %v1192 = vmul.f32 1.0, %v1191
  %v1193 = vrcp.pop %v1190
  %v1194 = vmul.f32 1.0, %v1193
  %v1195 = vtanh.pop %v1181
  %v1196 = vtanh.pop %v1182
  %v1197 = vmul.f32 %v1192, %v1075
  %v1198 = vmul.f32 %v1194, %v1076
  %1201 = vrot.lane.b32.xlu0 %v1195, 64
  %v1202 = vpop.permute.xlu0 %1201
  %1203 = vrot.lane.b32.xlu0 %v1196, 64
  %v1204 = vpop.permute.xlu0 %1203
  %v1207 = vmul.f32 %v1192, %v1202
  %v1208 = vmul.f32 %v1194, %v1204
  %1211 = vrot.lane.b32.xlu0 %v1207, 32
  %v1212 = vpop.permute.xlu0 %1211
  %1213 = vrot.lane.b32.xlu0 %v1208, 32
  %v1214 = vpop.permute.xlu0 %1213
  %v1217 = vadd.f32 %v1197, %v1212
  %v1218 = vadd.f32 %v1198, %v1214
  %v1219 = vtanh.pop %v1217
  %v1220 = vtanh.pop %v1218
  %1223 = vrot.lane.b32.xlu0 %v1219, 64
  %v1224 = vpop.permute.xlu0 %1223
  %1225 = vrot.lane.b32.xlu0 %v1220, 64
  %v1226 = vpop.permute.xlu0 %1225
  %v1229 = vmul.f32 %v1192, %v1224
  %v1230 = vmul.f32 %v1194, %v1226
  %1233 = vrot.lane.b32.xlu0 %v1229, 32
  %v1234 = vpop.permute.xlu0 %1233
  %1235 = vrot.lane.b32.xlu0 %v1230, 32
  %v1236 = vpop.permute.xlu0 %1235
  %1239 = vst.msk [vmem:[#allocation5 + $0x5] sm:$0x1] %vm527, %v1234
  %1240 = vst.msk [vmem:[#allocation5 + $0xd] sm:$0x1] %vm527, %v1236
  %v1241 = vld [vmem:[#allocation4 + $0x6] sm:$0x1]
  %v1242 = vld [vmem:[#allocation4 + $0xe] sm:$0x1]
  %v1243 = vrot.slane %v1230, 7
  %v1244 = vsel %vm533, %v1243, %v1229
  %1245 = vrot.lane.b32.xlu0 %v1244, 32
  %v1246 = vpop.permute.xlu0 %1245
  %v1247 = vsel %vm391, %v1246, 0
  %1249 = vmatprep.subr.mxu0 0.0
  %1250 = vmatpush1.msra.mxu0 0.0
  %1251 = vmatprep.subr.mxu0 0.0
  %1252 = vmatpush1.msra.mxu0 0.0
  %1253 = vmatprep.subr.mxu0 0.0
  %1254 = vmatpush1.msra.mxu0 0.0
  %1255 = vmatprep.subr.mxu0 0.0
  %1256 = vmatpush1.msra.mxu0 0.0
  %1257 = vmatprep.subr.mxu0 0.0
  %1258 = vmatpush1.msra.mxu0 0.0
  %1259 = vmatprep.subr.mxu0 0.0
  %1260 = vmatpush1.msra.mxu0 0.0
  %1261 = vmatprep.subr.mxu0 0.0
  %1262 = vmatpush1.msra.mxu0 0.0
  %1263 = vmatprep.subr.mxu0 0.0
  %1264 = vmatpush1.msra.mxu0 0.0
  %1265 = vmatprep.subr.mxu0 0.0
  %1266 = vmatpush1.msra.mxu0 0.0
  %1267 = vmatprep.subr.mxu0 0.0
  %1268 = vmatpush1.msra.mxu0 0.0
  %1269 = vmatprep.subr.mxu0 0.0
  %1270 = vmatpush1.msra.mxu0 0.0
  %1271 = vmatprep.subr.mxu0 0.0
  %1272 = vmatpush1.msra.mxu0 0.0
  %1273 = vmatprep.subr.mxu0 0.0
  %1274 = vmatpush1.msra.mxu0 %v388
  %1275 = vmatprep.subr.mxu0 0.0
  %1276 = vmatpush1.msra.mxu0 %v387
  %1277 = vmatprep.subr.mxu0 0.0
  %1278 = vmatpush1.msra.mxu0 %v386
  %1279 = vmatprep.subr.mxu0 0.0
  %1280 = vmatpush1.msra.mxu0 %v385
  %1281 = vmatprep.subr.mxu0 0.0
  %1282 = vmatpush2.msra.mxu0 0.0
  %1283 = vmatprep.subr.mxu0 0.0
  %1284 = vmatpush2.msra.mxu0 0.0
  %1285 = vmatprep.subr.mxu0 0.0
  %1286 = vmatpush2.msra.mxu0 0.0
  %1287 = vmatprep.subr.mxu0 0.0
  %1288 = vmatpush2.msra.mxu0 0.0
  %1289 = vmatprep.subr.mxu0 0.0
  %1290 = vmatpush2.msra.mxu0 0.0
  %1291 = vmatprep.subr.mxu0 0.0
  %1292 = vmatpush2.msra.mxu0 0.0
  %1293 = vmatprep.subr.mxu0 0.0
  %1294 = vmatpush2.msra.mxu0 0.0
  %1295 = vmatprep.subr.mxu0 0.0
  %1296 = vmatpush2.msra.mxu0 0.0
  %1297 = vmatprep.subr.mxu0 0.0
  %1298 = vmatpush2.msra.mxu0 0.0
  %1299 = vmatprep.subr.mxu0 0.0
  %1300 = vmatpush2.msra.mxu0 0.0
  %1301 = vmatprep.subr.mxu0 0.0
  %1302 = vmatpush2.msra.mxu0 0.0
  %1303 = vmatprep.subr.mxu0 0.0
  %1304 = vmatpush2.msra.mxu0 0.0
  %1305 = vmatprep.subr.mxu0 0.0
  %1306 = vmatpush2.msra.mxu0 0.0
  %1307 = vmatprep.subr.mxu0 0.0
  %1308 = vmatpush2.msra.mxu0 0.0
  %1309 = vmatprep.subr.mxu0 0.0
  %1310 = vmatpush2.msra.mxu0 0.0
  %1311 = vmatprep.subr.mxu0 0.0
  %1312 = vmatpush2.msra.mxu0 0.0
  %1313 = vmatprep.mubr.f32.mxu0 0.0
  %1314 = vmatmul.mubr.f32.gmra.mxu0 %v1247
  %v1315 = vpop.f32.mrf.mxu0
  %v1316 = vadd.f32 0.0, %v1315
  %v1317 = vpop.f32.mrf.mxu0
  %1318 = vdwg.mxu0
  %v1320 = vrot.slane %v1316, 1
  %v1323 = vadd.f32 %v1241, %v1316
  %v1324 = vadd.f32 %v1242, %v1320
  %v1325 = vxor.u32 %v1323, 2147483648
  %v1326 = vxor.u32 %v1324, 2147483648
  %v1327 = vmul.f32 %v1325, 1.442695
  %v1328 = vpow.pop %v1327
  %v1329 = vmul.f32 %v1326, 1.442695
  %v1330 = vpow.pop %v1329
  %v1331 = vadd.f32 %v1328, 1.0
  %v1332 = vadd.f32 %v1330, 1.0
  %v1333 = vrcp.pop %v1331
  %v1334 = vmul.f32 1.0, %v1333
  %v1335 = vrcp.pop %v1332
  %v1336 = vmul.f32 1.0, %v1335
  %v1337 = vtanh.pop %v1323
  %v1338 = vtanh.pop %v1324
  %v1339 = vmul.f32 %v1334, %v1217
  %v1340 = vmul.f32 %v1336, %v1218
  %1343 = vrot.lane.b32.xlu0 %v1337, 64
  %v1344 = vpop.permute.xlu0 %1343
  %1345 = vrot.lane.b32.xlu0 %v1338, 64
  %v1346 = vpop.permute.xlu0 %1345
  %v1349 = vmul.f32 %v1334, %v1344
  %v1350 = vmul.f32 %v1336, %v1346
  %1353 = vrot.lane.b32.xlu0 %v1349, 32
  %v1354 = vpop.permute.xlu0 %1353
  %1355 = vrot.lane.b32.xlu0 %v1350, 32
  %v1356 = vpop.permute.xlu0 %1355
  %v1359 = vadd.f32 %v1339, %v1354
  %v1360 = vadd.f32 %v1340, %v1356
  %v1361 = vtanh.pop %v1359
  %v1362 = vtanh.pop %v1360
  %1365 = vrot.lane.b32.xlu0 %v1361, 64
  %v1366 = vpop.permute.xlu0 %1365
  %1367 = vrot.lane.b32.xlu0 %v1362, 64
  %v1368 = vpop.permute.xlu0 %1367
  %v1371 = vmul.f32 %v1334, %v1366
  %v1372 = vmul.f32 %v1336, %v1368
  %1375 = vrot.lane.b32.xlu0 %v1371, 32
  %v1376 = vpop.permute.xlu0 %1375
  %1377 = vrot.lane.b32.xlu0 %v1372, 32
  %v1378 = vpop.permute.xlu0 %1377
  %1381 = vst.msk [vmem:[#allocation5 + $0x6] sm:$0x1] %vm527, %v1376
  %1382 = vst.msk [vmem:[#allocation5 + $0xe] sm:$0x1] %vm527, %v1378
  %v1383 = vld [vmem:[#allocation4 + $0x7] sm:$0x1]
  %v1384 = vld [vmem:[#allocation4 + $0xf] sm:$0x1]
  %v1385 = vrot.slane %v1372, 7
  %v1386 = vsel %vm533, %v1385, %v1371
  %1387 = vrot.lane.b32.xlu0 %v1386, 32
  %v1388 = vpop.permute.xlu0 %1387
  %v1389 = vsel %vm391, %v1388, 0
  %1391 = vmatprep.subr.mxu0 0.0
  %1392 = vmatpush1.msra.mxu0 0.0
  %1393 = vmatprep.subr.mxu0 0.0
  %1394 = vmatpush1.msra.mxu0 0.0
  %1395 = vmatprep.subr.mxu0 0.0
  %1396 = vmatpush1.msra.mxu0 0.0
  %1397 = vmatprep.subr.mxu0 0.0
  %1398 = vmatpush1.msra.mxu0 0.0
  %1399 = vmatprep.subr.mxu0 0.0
  %1400 = vmatpush1.msra.mxu0 0.0
  %1401 = vmatprep.subr.mxu0 0.0
  %1402 = vmatpush1.msra.mxu0 0.0
  %1403 = vmatprep.subr.mxu0 0.0
  %1404 = vmatpush1.msra.mxu0 0.0
  %1405 = vmatprep.subr.mxu0 0.0
  %1406 = vmatpush1.msra.mxu0 0.0
  %1407 = vmatprep.subr.mxu0 0.0
  %1408 = vmatpush1.msra.mxu0 0.0
  %1409 = vmatprep.subr.mxu0 0.0
  %1410 = vmatpush1.msra.mxu0 0.0
  %1411 = vmatprep.subr.mxu0 0.0
  %1412 = vmatpush1.msra.mxu0 0.0
  %1413 = vmatprep.subr.mxu0 0.0
  %1414 = vmatpush1.msra.mxu0 0.0
  %1415 = vmatprep.subr.mxu0 0.0
  %1416 = vmatpush1.msra.mxu0 %v388
  %1417 = vmatprep.subr.mxu0 0.0
  %1418 = vmatpush1.msra.mxu0 %v387
  %1419 = vmatprep.subr.mxu0 0.0
  %1420 = vmatpush1.msra.mxu0 %v386
  %1421 = vmatprep.subr.mxu0 0.0
  %1422 = vmatpush1.msra.mxu0 %v385
  %1423 = vmatprep.subr.mxu0 0.0
  %1424 = vmatpush2.msra.mxu0 0.0
  %1425 = vmatprep.subr.mxu0 0.0
  %1426 = vmatpush2.msra.mxu0 0.0
  %1427 = vmatprep.subr.mxu0 0.0
  %1428 = vmatpush2.msra.mxu0 0.0
  %1429 = vmatprep.subr.mxu0 0.0
  %1430 = vmatpush2.msra.mxu0 0.0
  %1431 = vmatprep.subr.mxu0 0.0
  %1432 = vmatpush2.msra.mxu0 0.0
  %1433 = vmatprep.subr.mxu0 0.0
  %1434 = vmatpush2.msra.mxu0 0.0
  %1435 = vmatprep.subr.mxu0 0.0
  %1436 = vmatpush2.msra.mxu0 0.0
  %1437 = vmatprep.subr.mxu0 0.0
  %1438 = vmatpush2.msra.mxu0 0.0
  %1439 = vmatprep.subr.mxu0 0.0
  %1440 = vmatpush2.msra.mxu0 0.0
  %1441 = vmatprep.subr.mxu0 0.0
  %1442 = vmatpush2.msra.mxu0 0.0
  %1443 = vmatprep.subr.mxu0 0.0
  %1444 = vmatpush2.msra.mxu0 0.0
  %1445 = vmatprep.subr.mxu0 0.0
  %1446 = vmatpush2.msra.mxu0 0.0
  %1447 = vmatprep.subr.mxu0 0.0
  %1448 = vmatpush2.msra.mxu0 0.0
  %1449 = vmatprep.subr.mxu0 0.0
  %1450 = vmatpush2.msra.mxu0 0.0
  %1451 = vmatprep.subr.mxu0 0.0
  %1452 = vmatpush2.msra.mxu0 0.0
  %1453 = vmatprep.subr.mxu0 0.0
  %1454 = vmatpush2.msra.mxu0 0.0
  %1455 = vmatprep.mubr.f32.mxu0 0.0
  %1456 = vmatmul.mubr.f32.gmra.mxu0 %v1389
  %v1457 = vpop.f32.mrf.mxu0
  %v1458 = vadd.f32 0.0, %v1457
  %v1459 = vpop.f32.mrf.mxu0
  %1460 = vdwg.mxu0
  %v1462 = vrot.slane %v1458, 1
  %v1465 = vadd.f32 %v1383, %v1458
  %v1466 = vadd.f32 %v1384, %v1462
  %v1467 = vxor.u32 %v1465, 2147483648
  %v1468 = vxor.u32 %v1466, 2147483648
  %v1469 = vmul.f32 %v1467, 1.442695
  %v1470 = vpow.pop %v1469
  %v1471 = vmul.f32 %v1468, 1.442695
  %v1472 = vpow.pop %v1471
  %v1473 = vadd.f32 %v1470, 1.0
  %v1474 = vadd.f32 %v1472, 1.0
  %v1475 = vrcp.pop %v1473
  %v1476 = vmul.f32 1.0, %v1475
  %v1477 = vrcp.pop %v1474
  %v1478 = vmul.f32 1.0, %v1477
  %v1479 = vtanh.pop %v1465
  %v1480 = vtanh.pop %v1466
  %v1481 = vmul.f32 %v1476, %v1359
  %v1482 = vmul.f32 %v1478, %v1360
  %1485 = vrot.lane.b32.xlu0 %v1479, 64
  %v1486 = vpop.permute.xlu0 %1485
  %1487 = vrot.lane.b32.xlu0 %v1480, 64
  %v1488 = vpop.permute.xlu0 %1487
  %v1491 = vmul.f32 %v1476, %v1486
  %v1492 = vmul.f32 %v1478, %v1488
  %1495 = vrot.lane.b32.xlu0 %v1491, 32
  %v1496 = vpop.permute.xlu0 %1495
  %1497 = vrot.lane.b32.xlu0 %v1492, 32
  %v1498 = vpop.permute.xlu0 %1497
  %v1501 = vadd.f32 %v1481, %v1496
  %v1502 = vadd.f32 %v1482, %v1498
  %v1503 = vtanh.pop %v1501
  %v1504 = vtanh.pop %v1502
  %1507 = vrot.lane.b32.xlu0 %v1503, 64
  %v1508 = vpop.permute.xlu0 %1507
  %1509 = vrot.lane.b32.xlu0 %v1504, 64
  %v1510 = vpop.permute.xlu0 %1509
  %v1513 = vmul.f32 %v1476, %v1508
  %v1514 = vmul.f32 %v1478, %v1510
  %1517 = vrot.lane.b32.xlu0 %v1513, 32
  %v1518 = vpop.permute.xlu0 %1517
  %1519 = vrot.lane.b32.xlu0 %v1514, 32
  %v1520 = vpop.permute.xlu0 %1519
  %1523 = vst.msk [vmem:[#allocation5 + $0x7] sm:$0x1] %vm527, %v1518
  %1524 = vst.msk [vmem:[#allocation5 + $0xf] sm:$0x1] %vm527, %v1520
  %v1525 = vld [vmem:[#allocation5] sm:$0xff]
  %v1526 = vld [vmem:[#allocation5 + $0x8] sm:$0xff]
  %v1527 = vld [vmem:[%s8] sm:$0xff]
  %v1528 = vld [vmem:[%s8 + $0x8] sm:$0xff]
  %v1529 = vld [vmem:[%s8 + $0x10] sm:$0xff]
  %v1530 = vld [vmem:[%s8 + $0x18] sm:$0xff]
  %v1531 = vld [vmem:[%s9] sm:$0x1]
  %v1533 = vlaneseq
  %v1534 = vshrl.u32 %v1533, 7
  %v1535 = vsub.s32 0, %v1534
  %v1536 = vrot.slane %v1531, %v1535
  %v1539 = vsel %vm391, %v1525, 0
  %v1542 = vsel %vm391, %v1526, 0
  %1544 = vmatprep.subr.mxu0 0.0
  %1545 = vmatpush1.msra.mxu0 0.0
  %1546 = vmatprep.subr.mxu0 0.0
  %1547 = vmatpush1.msra.mxu0 0.0
  %1548 = vmatprep.subr.mxu0 0.0
  %1549 = vmatpush1.msra.mxu0 0.0
  %1550 = vmatprep.subr.mxu0 0.0
  %1551 = vmatpush1.msra.mxu0 0.0
  %1552 = vmatprep.subr.mxu0 0.0
  %1553 = vmatpush1.msra.mxu0 0.0
  %1554 = vmatprep.subr.mxu0 0.0
  %1555 = vmatpush1.msra.mxu0 0.0
  %1556 = vmatprep.subr.mxu0 0.0
  %1557 = vmatpush1.msra.mxu0 0.0
  %1558 = vmatprep.subr.mxu0 0.0
  %1559 = vmatpush1.msra.mxu0 0.0
  %1560 = vmatprep.subr.mxu0 0.0
  %1561 = vmatpush1.msra.mxu0 0.0
  %1562 = vmatprep.subr.mxu0 0.0
  %1563 = vmatpush1.msra.mxu0 0.0
  %1564 = vmatprep.subr.mxu0 0.0
  %1565 = vmatpush1.msra.mxu0 0.0
  %1566 = vmatprep.subr.mxu0 0.0
  %1567 = vmatpush1.msra.mxu0 0.0
  %1568 = vmatprep.subr.mxu0 0.0
  %1569 = vmatpush1.msra.mxu0 %v1530
  %1570 = vmatprep.subr.mxu0 0.0
  %1571 = vmatpush1.msra.mxu0 %v1529
  %1572 = vmatprep.subr.mxu0 0.0
  %1573 = vmatpush1.msra.mxu0 %v1528
  %1574 = vmatprep.subr.mxu0 0.0
  %1575 = vmatpush1.msra.mxu0 %v1527
  %1576 = vmatprep.subr.mxu0 0.0
  %1577 = vmatpush2.msra.mxu0 0.0
  %1578 = vmatprep.subr.mxu0 0.0
  %1579 = vmatpush2.msra.mxu0 0.0
  %1580 = vmatprep.subr.mxu0 0.0
  %1581 = vmatpush2.msra.mxu0 0.0
  %1582 = vmatprep.subr.mxu0 0.0
  %1583 = vmatpush2.msra.mxu0 0.0
  %1584 = vmatprep.subr.mxu0 0.0
  %1585 = vmatpush2.msra.mxu0 0.0
  %1586 = vmatprep.subr.mxu0 0.0
  %1587 = vmatpush2.msra.mxu0 0.0
  %1588 = vmatprep.subr.mxu0 0.0
  %1589 = vmatpush2.msra.mxu0 0.0
  %1590 = vmatprep.subr.mxu0 0.0
  %1591 = vmatpush2.msra.mxu0 0.0
  %1592 = vmatprep.subr.mxu0 0.0
  %1593 = vmatpush2.msra.mxu0 0.0
  %1594 = vmatprep.subr.mxu0 0.0
  %1595 = vmatpush2.msra.mxu0 0.0
  %1596 = vmatprep.subr.mxu0 0.0
  %1597 = vmatpush2.msra.mxu0 0.0
  %1598 = vmatprep.subr.mxu0 0.0
  %1599 = vmatpush2.msra.mxu0 0.0
  %1600 = vmatprep.subr.mxu0 0.0
  %1601 = vmatpush2.msra.mxu0 0.0
  %1602 = vmatprep.subr.mxu0 0.0
  %1603 = vmatpush2.msra.mxu0 0.0
  %1604 = vmatprep.subr.mxu0 0.0
  %1605 = vmatpush2.msra.mxu0 0.0
  %1606 = vmatprep.subr.mxu0 0.0
  %1607 = vmatpush2.msra.mxu0 0.0
  %1608 = vmatprep.mubr.f32.mxu0 0.0
  %1609 = vmatmul.mubr.f32.gmra.mxu0 %v1539
  %v1610 = vpop.f32.mrf.mxu0
  %v1611 = vadd.f32 %v1536, %v1610
  %v1612 = vpop.f32.mrf.mxu0
  %1613 = vmatprep.mubr.f32.mxu0 0.0
  %1614 = vmatmul.mubr.f32.gmra.mxu0 %v1542
  %v1615 = vpop.f32.mrf.mxu0
  %v1616 = vadd.f32 %v1536, %v1615
  %v1617 = vpop.f32.mrf.mxu0
  %1618 = vdwg.mxu0
  %1619 = vst.msk [vmem:[%s10] sm:$0xff] %vm37, %v1611
  %1620 = vst.msk [vmem:[%s10 + $0x8] sm:$0xff] %vm37, %v1616
  // Predicated region
  $region42: #{tpu_custom_call.1} parent=0 // pred_check
    _
  $region43: #{tpu_custom_call.1} parent=0 // pred_check_branch
    %1622 = sbr.rel (0) target = $region45
  $region44: #{tpu_custom_call.1} parent=0 // pred_region
    _
  $region45: #{tpu_custom_call.1} parent=0 // pred_fallthru
    _
  // Predicated region
  $region46: #{tpu_custom_call.1} parent=0 // pred_check
    _
  $region47: #{tpu_custom_call.1} parent=0 // pred_check_branch
    %1624 = sbr.rel (0) target = $region49
  $region48: #{tpu_custom_call.1} parent=0 // pred_region
    _
  $region49: #{tpu_custom_call.1} parent=0 // pred_fallthru
    _

</llo_original>
